<compile_context>
chip_gen: v5e
topology: v5e:2x2
jax: 0.10.0
libtpu: 0.0.40
codegen_flags: <defaults>
</compile_context>

<pallas_src>
import math
import functools

import jax
import jax.numpy as jnp
from jax import lax
from jax.experimental import pallas as pl
from jax.experimental.pallas import tpu as pltpu

_LN_EPS = 1e-5
_NEG_BIG = -1e30  # finite stand-in for -inf; avoids NaN when a row is fully masked


def _layernorm_f32(h, w, b):
    h = h.astype(jnp.float32)
    mu = jnp.mean(h, axis=-1, keepdims=True)
    var = jnp.mean(jnp.square(h - mu), axis=-1, keepdims=True)
    return (h - mu) * lax.rsqrt(var + _LN_EPS) * w.astype(jnp.float32) + b.astype(jnp.float32)


def _new_gelu(x):
    return 0.5 * x * (1.0 + jnp.tanh(math.sqrt(2.0 / math.pi) * (x + 0.044715 * x * x * x)))


def _invariant_spec(arr):
    """Full-array block whose index never changes -> single buffer (no wasted VMEM)."""
    nd = arr.ndim
    return pl.BlockSpec(arr.shape, lambda *_, _nd=nd: (0,) * _nd,
                        pipeline_mode=pl.Buffered(1))


def _pick_tile(total, candidates):
    for c in candidates:
        if c <= total and total % c == 0:
            return c
    return total


def _vmem_limit_bytes():
    cap = 128 * 1024 * 1024
    try:
        info = pltpu.get_tpu_info()
        cap = int(getattr(info, "vmem_capacity_bytes", cap))
    except Exception:
        pass
    return cap - cap // 8  # headroom for compiler scratch: ~112 MiB v5e/v6e, ~56 MiB v7x


# ---------------------------------------------------------------------------
# Pass 1: LN1 + QKV projection, row-tiled.  q is pre-scaled by 1/sqrt(hd).
# grid = (rows // TR,)
# ---------------------------------------------------------------------------
def _qkv_kernel(x_ref, ln1w_ref, ln1b_ref,
                wq_ref, bq_ref, wk_ref, bk_ref, wv_ref, bv_ref,
                q_ref, k_ref, v_ref, *, scale, compute_dtype):
    h1 = _layernorm_f32(x_ref[...], ln1w_ref[...], ln1b_ref[...]).astype(compute_dtype)
    q = jnp.dot(h1, wq_ref[...], preferred_element_type=jnp.float32) + bq_ref[...]
    k = jnp.dot(h1, wk_ref[...], preferred_element_type=jnp.float32) + bk_ref[...]
    v = jnp.dot(h1, wv_ref[...], preferred_element_type=jnp.float32) + bv_ref[...]
    q_ref[...] = (q * scale).astype(q_ref.dtype)
    k_ref[...] = k.astype(k_ref.dtype)
    v_ref[...] = v.astype(v_ref.dtype)


# ---------------------------------------------------------------------------
# Pass 2: flash attention + c_proj + residual.
# grid = (B, T // TQ, T // TK); the key axis is an online-softmax reduction with
# (q, m, l, acc) scratch; x/q blocks are revisited (constant index) along it.
# ---------------------------------------------------------------------------
def _attn_kernel(x_ref, q_ref, k_ref, v_ref, mask_ref, wap_ref, bap_ref,
                 out_ref,
                 q_scr, m_scr, l_scr, acc_scr,
                 *, n_head, head_dim, compute_dtype):
    ki = pl.program_id(2)
    TQ, C = q_ref.shape
    TK = k_ref.shape[0]
    H, hd = n_head, head_dim
    cdt = compute_dtype

    @pl.when(ki == 0)
    def _():
        # head-major scaled Q, cached for the whole key sweep of this query tile
        q_scr[...] = jnp.transpose(q_ref[...].reshape(TQ, H, hd), (1, 0, 2)).astype(cdt)
        m_scr[...] = jnp.full_like(m_scr, -jnp.inf)
        l_scr[...] = jnp.zeros_like(l_scr)
        acc_scr[...] = jnp.zeros_like(acc_scr)

    k3 = jnp.transpose(k_ref[...].reshape(TK, H, hd), (1, 0, 2))          # (H, TK, hd)
    v3 = jnp.transpose(v_ref[...].reshape(TK, H, hd), (1, 0, 2))          # (H, TK, hd)

    s = jnp.einsum('hqd,hkd->hqk', q_scr[...], k3,
                   preferred_element_type=jnp.float32)                    # (H, TQ, TK)
    key_masked = (mask_ref[...] != 0.0)[None]                             # (1, 1, TK)
    s = jnp.where(key_masked, _NEG_BIG, s)

    m_prev = m_scr[...]
    m_new = jnp.maximum(m_prev, jnp.max(s, axis=-1, keepdims=True))
    alpha = jnp.exp(m_prev - m_new)
    p = jnp.exp(s - m_new)
    l_scr[...] = alpha * l_scr[...] + jnp.sum(p, axis=-1, keepdims=True)
    acc_scr[...] = alpha * acc_scr[...] + jnp.einsum(
        'hqk,hkd->hqd', p.astype(cdt), v3, preferred_element_type=jnp.float32)
    m_scr[...] = m_new

    @pl.when(ki == pl.num_programs(2) - 1)
    def _():
        y3 = acc_scr[...] * pl.reciprocal(l_scr[...], approx=True)        # (H, TQ, hd)
        y = jnp.transpose(y3, (1, 0, 2)).reshape(TQ, C).astype(cdt)        # (TQ, C)
        attn = jnp.dot(y, wap_ref[...], preferred_element_type=jnp.float32) + bap_ref[...]
        out_ref[...] = (x_ref[...].astype(jnp.float32) + attn).astype(out_ref.dtype)


# ---------------------------------------------------------------------------
# Pass 3: LN2 + MLP + residual.  grid = (rows // TM, hidden // KT).
# When KT == hidden the weights are fully resident (single-buffered) and the
# reduction loop degenerates to one step; otherwise the hidden dim is streamed
# with an f32 accumulator.
# ---------------------------------------------------------------------------
def _mlp_kernel(x_ref, ln2w_ref, ln2b_ref,
                wfc_ref, bfc_ref, wmp_ref, bmp_ref,
                out_ref,
                h2_scr, acc_scr, *, compute_dtype):
    k = pl.program_id(1)
    cdt = compute_dtype

    @pl.when(k == 0)
    def _():
        h2_scr[...] = _layernorm_f32(x_ref[...], ln2w_ref[...], ln2b_ref[...]).astype(cdt)
        acc_scr[...] = jnp.zeros_like(acc_scr)

    fc = jnp.dot(h2_scr[...], wfc_ref[...], preferred_element_type=jnp.float32) + bfc_ref[...]
    g = _new_gelu(fc).astype(cdt)
    acc_scr[...] += jnp.dot(g, wmp_ref[...], preferred_element_type=jnp.float32)

    @pl.when(k == pl.num_programs(1) - 1)
    def _():
        out_ref[...] = (x_ref[...].astype(jnp.float32) + acc_scr[...]
                        + bmp_ref[...]).astype(out_ref.dtype)


def gpt_block(x, mask, params, n_head, *, tq=None, tk=None, tr=None, tm=None, kt=None,
              compute_dtype=None):
    B, T, C = x.shape
    assert C % n_head == 0
    hd = C // n_head
    hidden = params["w_fc"].shape[1]
    R = B * T
    f32 = jnp.float32

    if compute_dtype is None:
        compute_dtype = jnp.bfloat16 if x.dtype == jnp.bfloat16 else jnp.float32
    cdt = compute_dtype
    wsz = 2 if cdt == jnp.bfloat16 else 4
    dsz = x.dtype.itemsize
    vmem_limit = _vmem_limit_bytes()

    # ---- generation-aware default tiles ----
    if tq is None:
        tq = _pick_tile(T, (128,))
    if tk is None:
        tk = _pick_tile(T, (512, 256, 128))
    if tr is None:
        tr = _pick_tile(R, (1024, 512, 256, 128))
    if tm is None:
        tm = _pick_tile(R, (1024, 768, 640, 512, 256, 128))
    if kt is None:
        # keep both MLP weights fully resident when they comfortably fit (v5e/v6e);
        # otherwise stream the hidden dim in K-tiles (v7x's 64 MiB VMEM budget).
        weights_resident = 2 * C * hidden * wsz <= vmem_limit // 4
        kt = hidden if weights_resident else _pick_tile(hidden, (512, 256, 128))
    assert T % tq == 0 and T % tk == 0 and R % tr == 0 and R % tm == 0 and hidden % kt == 0
    assert (tq % 8 == 0 or tq == T) and (tm % 8 == 0 or tm == R) and (tr % 8 == 0 or tr == R)
    assert (tk % 128 == 0 or tk == T) and (kt % 128 == 0 or kt == hidden)

    # MXU-feeding weights in compute dtype; LN params & biases stay f32 (f32 accumulation).
    ln1w = params["ln1_w"].astype(f32)
    ln1b = params["ln1_b"].astype(f32)
    ln2w = params["ln2_w"].astype(f32)
    ln2b = params["ln2_b"].astype(f32)
    w_attn = params["w_attn"]
    b_attn = params["b_attn"].astype(f32)
    wq, wk, wv = (w_attn[:, :C].astype(cdt),
                  w_attn[:, C:2 * C].astype(cdt),
                  w_attn[:, 2 * C:].astype(cdt))
    bq, bk, bv = b_attn[:, :C], b_attn[:, C:2 * C], b_attn[:, 2 * C:]
    wap = params["w_aproj"].astype(cdt)
    bap = params["b_aproj"].astype(f32)
    wfc = params["w_fc"].astype(cdt)
    bfc = params["b_fc"].astype(f32)
    wmp = params["w_mproj"].astype(cdt)
    bmp = params["b_mproj"].astype(f32)
    mask = mask.astype(f32)

    # ---------------- pass 1: LN1 + QKV ----------------
    x2d = x.reshape(R, C)
    scale = 1.0 / math.sqrt(hd)
    qkv_weights = [ln1w, ln1b, wq, bq, wk, bk, wv, bv]
    qkv_cost = pl.CostEstimate(
        flops=int(6 * R * C * C), transcendentals=int(R),
        bytes_accessed=int(R * C * dsz + 3 * R * C * wsz + 3 * C * C * wsz + 8 * C * 4))

    q2d, k2d, v2d = pl.pallas_call(
        functools.partial(_qkv_kernel, scale=scale, compute_dtype=cdt),
        out_shape=tuple(jax.ShapeDtypeStruct((R, C), cdt) for _ in range(3)),
        grid=(R // tr,),
        in_specs=[pl.BlockSpec((tr, C), lambda r: (r, 0))]
                 + [_invariant_spec(w) for w in qkv_weights],
        out_specs=[pl.BlockSpec((tr, C), lambda r: (r, 0)) for _ in range(3)],
        compiler_params=pltpu.CompilerParams(
            dimension_semantics=("parallel",), vmem_limit_bytes=vmem_limit),
        cost_estimate=qkv_cost,
    )(x2d, *qkv_weights)
    q = q2d.reshape(B, T, C)
    k = k2d.reshape(B, T, C)
    v = v2d.reshape(B, T, C)

    # ---------------- pass 2: flash attention + c_proj + residual ----------------
    n_qt, n_kt_a = T // tq, T // tk
    attn_cost = pl.CostEstimate(
        flops=int(B * (4 * T * T * C + 2 * T * C * C)),
        transcendentals=int(B * n_head * T * (T + n_kt_a)),
        bytes_accessed=int(B * T * C * (2 * dsz + wsz) + n_qt * 2 * B * T * C * wsz
                           + B * T * 4 + C * C * wsz + C * 4))

    x1 = pl.pallas_call(
        functools.partial(_attn_kernel, n_head=n_head, head_dim=hd, compute_dtype=cdt),
        out_shape=jax.ShapeDtypeStruct((B, T, C), x.dtype),
        grid=(B, n_qt, n_kt_a),
        in_specs=[pl.BlockSpec((None, tq, C), lambda b, qi, ki: (b, qi, 0)),   # x (residual)
                  pl.BlockSpec((None, tq, C), lambda b, qi, ki: (b, qi, 0)),   # q (pre-scaled)
                  pl.BlockSpec((None, tk, C), lambda b, qi, ki: (b, ki, 0)),   # k tile
                  pl.BlockSpec((None, tk, C), lambda b, qi, ki: (b, ki, 0)),   # v tile
                  pl.BlockSpec((1, tk), lambda b, qi, ki: (b, ki)),            # key mask tile
                  _invariant_spec(wap), _invariant_spec(bap)],
        out_specs=pl.BlockSpec((None, tq, C), lambda b, qi, ki: (b, qi, 0)),
        scratch_shapes=[pltpu.VMEM((n_head, tq, hd), cdt),        # head-major Q cache
                        pltpu.VMEM((n_head, tq, 1), f32),         # running max
                        pltpu.VMEM((n_head, tq, 1), f32),         # running denominator
                        pltpu.VMEM((n_head, tq, hd), f32)],       # output accumulator
        compiler_params=pltpu.CompilerParams(
            dimension_semantics=("parallel", "parallel", "arbitrary"),
            vmem_limit_bytes=vmem_limit),
        cost_estimate=attn_cost,
    )(x, q, k, v, mask, wap, bap)

    # ---------------- pass 3: LN2 + MLP + residual ----------------
    x1_2d = x1.reshape(R, C)
    n_rt, n_kt = R // tm, hidden // kt
    wfc_spec = _invariant_spec(wfc) if n_kt == 1 else pl.BlockSpec((C, kt), lambda r, kk: (0, kk))
    bfc_spec = _invariant_spec(bfc) if n_kt == 1 else pl.BlockSpec((1, kt), lambda r, kk: (0, kk))
    wmp_spec = _invariant_spec(wmp) if n_kt == 1 else pl.BlockSpec((kt, C), lambda r, kk: (kk, 0))
    mlp_cost = pl.CostEstimate(
        flops=int(4 * R * C * hidden),
        transcendentals=int(R * hidden),
        bytes_accessed=int(2 * R * C * dsz
                           + 2 * C * hidden * wsz * (1 if n_kt == 1 else n_rt)
                           + (hidden + 3 * C) * 4))

    y = pl.pallas_call(
        functools.partial(_mlp_kernel, compute_dtype=cdt),
        out_shape=jax.ShapeDtypeStruct((R, C), x.dtype),
        grid=(n_rt, n_kt),
        in_specs=[pl.BlockSpec((tm, C), lambda r, kk: (r, 0)),
                  _invariant_spec(ln2w), _invariant_spec(ln2b),
                  wfc_spec, bfc_spec, wmp_spec,
                  _invariant_spec(bmp)],
        out_specs=pl.BlockSpec((tm, C), lambda r, kk: (r, 0)),
        scratch_shapes=[pltpu.VMEM((tm, C), cdt),            # LN2(x) tile
                        pltpu.VMEM((tm, C), jnp.float32)],   # MLP accumulator
        compiler_params=pltpu.CompilerParams(
            dimension_semantics=("parallel", "arbitrary"),
            vmem_limit_bytes=vmem_limit),
        cost_estimate=mlp_cost,
    )(x1_2d, ln2w, ln2b, wfc, bfc, wmp, bmp)

    return y.reshape(B, T, C)


def reference_block(x, mask, params, n_head):
    """Pure-JAX reference mirroring the PyTorch forward (eval mode)."""
    B, T, C = x.shape
    hd = C // n_head
    h1 = _layernorm_f32(x, params["ln1_w"], params["ln1_b"])
    qkv = h1 @ params["w_attn"] + params["b_attn"]
    q, k, v = jnp.split(qkv, 3, axis=-1)
    q = q.reshape(B, T, n_head, hd).transpose(0, 2, 1, 3)
    k = k.reshape(B, T, n_head, hd).transpose(0, 2, 1, 3)
    v = v.reshape(B, T, n_head, hd).transpose(0, 2, 1, 3)
    att = jnp.einsum("bhqd,bhkd->bhqk", q, k) / math.sqrt(hd)
    att = jnp.where((mask != 0.0)[:, None, None, :], -jnp.inf, att)
    att = jax.nn.softmax(att, axis=-1)
    y = jnp.einsum("bhqk,bhkd->bhqd", att, v)
    y = y.transpose(0, 2, 1, 3).reshape(B, T, C)
    x = x + (y @ params["w_aproj"] + params["b_aproj"])
    h2 = _layernorm_f32(x, params["ln2_w"], params["ln2_b"])
    fc = h2 @ params["w_fc"] + params["b_fc"]
    x = x + (_new_gelu(fc) @ params["w_mproj"] + params["b_mproj"])
    return x


if __name__ == "__main__":
    B, T, C, n_head = 2, 256, 64, 4

    key = jax.random.PRNGKey(0)
    keys = jax.random.split(key, 12)

    params = {
        "ln1_w": 1.0 + 0.1 * jax.random.normal(keys[10], (1, C), jnp.float32),
        "ln1_b": 0.05 * jax.random.normal(keys[11], (1, C), jnp.float32),
        # nn.Linear weights are (out, in) with y = x W^T + b; pre-transposed to (in, out).
        "w_attn": 0.02 * jax.random.normal(keys[0], (C, 3 * C), jnp.float32),
        "b_attn": 0.01 * jax.random.normal(keys[1], (1, 3 * C), jnp.float32),
        "w_aproj": 0.02 * jax.random.normal(keys[2], (C, C), jnp.float32),
        "b_aproj": 0.01 * jax.random.normal(keys[3], (1, C), jnp.float32),
        "ln2_w": jnp.ones((1, C), jnp.float32),
        "ln2_b": jnp.zeros((1, C), jnp.float32),
        "w_fc": 0.02 * jax.random.normal(keys[4], (C, 4 * C), jnp.float32),
        "b_fc": 0.01 * jax.random.normal(keys[5], (1, 4 * C), jnp.float32),
        "w_mproj": 0.02 * jax.random.normal(keys[6], (4 * C, C), jnp.float32),
        "b_mproj": 0.01 * jax.random.normal(keys[7], (1, C), jnp.float32),
    }

    x = jax.random.normal(keys[8], (B, T, C), jnp.float32)
    # mask: nonzero entries are masked keys; keep at least the first key unmasked per batch.
    mask = (jax.random.uniform(keys[9], (B, T)) > 0.7).astype(jnp.float32)
    mask = mask.at[:, 0].set(0.0)

    ref = reference_block(x, mask, params, n_head)

    # (1) f32 with generation-aware default tiles (single key tile, resident MLP weights here).
    out = jax.block_until_ready(gpt_block(x, mask, params, n_head))
    assert out.shape == (B, T, C)
    assert bool(jnp.all(jnp.isfinite(out)))
    assert bool(jnp.allclose(out, ref, rtol=2e-3, atol=2e-3)), "f32 (defaults) mismatch"

    # (2) f32 with explicit small tiles: exercises the online-softmax key loop (2 key tiles),
    #     multiple QKV / MLP row tiles and the hidden-dim accumulator path.
    out_t = jax.block_until_ready(
        gpt_block(x, mask, params, n_head, tq=128, tk=128, tr=256, tm=256, kt=128))
    assert bool(jnp.all(jnp.isfinite(out_t)))
    assert bool(jnp.allclose(out_t, ref, rtol=2e-3, atol=2e-3)), "f32 (tiled) mismatch"

    # (3) bf16 compute path (bf16 MXU inputs, f32 accumulation) — looser tolerance vs f32 ref.
    out_bf = jax.block_until_ready(
        gpt_block(x.astype(jnp.bfloat16), mask, params, n_head, tk=128, kt=128))
    assert bool(jnp.all(jnp.isfinite(out_bf.astype(jnp.float32))))
    assert float(jnp.max(jnp.abs(out_bf.astype(jnp.float32) - ref))) < 0.15, "bf16 mismatch"

    print("KERNEL_OK")
</pallas_src>

<mosaic_0001>
module attributes {stable_mosaic.version = 11 : i64} {
  func.func @_qkv_kernel(%arg0: i32, %arg1: memref<512x64xf32, #tpu.memory_space<vmem>>, %arg2: memref<1x64xf32, #tpu.memory_space<vmem>>, %arg3: memref<1x64xf32, #tpu.memory_space<vmem>>, %arg4: memref<64x64xf32, #tpu.memory_space<vmem>>, %arg5: memref<1x64xf32, #tpu.memory_space<vmem>>, %arg6: memref<64x64xf32, #tpu.memory_space<vmem>>, %arg7: memref<1x64xf32, #tpu.memory_space<vmem>>, %arg8: memref<64x64xf32, #tpu.memory_space<vmem>>, %arg9: memref<1x64xf32, #tpu.memory_space<vmem>>, %arg10: memref<512x64xf32, #tpu.memory_space<vmem>>, %arg11: memref<512x64xf32, #tpu.memory_space<vmem>>, %arg12: memref<512x64xf32, #tpu.memory_space<vmem>>) attributes {dimension_semantics = [#tpu.dimension_semantics<parallel>], iteration_bounds = array<i64: 1>, scalar_prefetch = 0 : i64, scratch_operands = 0 : i64, tpu.core_type = #tpu.core_type<tc>, window_params = [{transform_indices = @transform_0, window_bounds = array<i64: 512, 64>}, {pipeline_mode = #tpu.pipeline_mode<synchronous>, transform_indices = @transform_1, window_bounds = array<i64: 1, 64>}, {pipeline_mode = #tpu.pipeline_mode<synchronous>, transform_indices = @transform_2, window_bounds = array<i64: 1, 64>}, {pipeline_mode = #tpu.pipeline_mode<synchronous>, transform_indices = @transform_3, window_bounds = array<i64: 64, 64>}, {pipeline_mode = #tpu.pipeline_mode<synchronous>, transform_indices = @transform_4, window_bounds = array<i64: 1, 64>}, {pipeline_mode = #tpu.pipeline_mode<synchronous>, transform_indices = @transform_5, window_bounds = array<i64: 64, 64>}, {pipeline_mode = #tpu.pipeline_mode<synchronous>, transform_indices = @transform_6, window_bounds = array<i64: 1, 64>}, {pipeline_mode = #tpu.pipeline_mode<synchronous>, transform_indices = @transform_7, window_bounds = array<i64: 64, 64>}, {pipeline_mode = #tpu.pipeline_mode<synchronous>, transform_indices = @transform_8, window_bounds = array<i64: 1, 64>}, {transform_indices = @transform_9, window_bounds = array<i64: 512, 64>}, {transform_indices = @transform_10, window_bounds = array<i64: 512, 64>}, {transform_indices = @transform_11, window_bounds = array<i64: 512, 64>}]} {
    %c0 = arith.constant 0 : index
    %c0_0 = arith.constant 0 : index
    %0 = vector.load %arg1[%c0, %c0_0] : memref<512x64xf32, #tpu.memory_space<vmem>>, vector<512x64xf32>
    %c0_1 = arith.constant 0 : index
    %c0_2 = arith.constant 0 : index
    %1 = vector.load %arg2[%c0_1, %c0_2] : memref<1x64xf32, #tpu.memory_space<vmem>>, vector<1x64xf32>
    %c0_3 = arith.constant 0 : index
    %c0_4 = arith.constant 0 : index
    %2 = vector.load %arg3[%c0_3, %c0_4] : memref<1x64xf32, #tpu.memory_space<vmem>>, vector<1x64xf32>
    %cst = arith.constant dense<0.000000e+00> : vector<512xf32>
    %3 = vector.multi_reduction <add>, %0, %cst [1] : vector<512x64xf32> to vector<512xf32>
    %4 = vector.shape_cast %3 : vector<512xf32> to vector<512x1xf32>
    %cst_5 = arith.constant 6.400000e+01 : f32
    %5 = vector.broadcast %cst_5 : f32 to vector<512x1xf32>
    %6 = arith.divf %4, %5 : vector<512x1xf32>
    %7 = vector.broadcast %6 : vector<512x1xf32> to vector<512x64xf32>
    %8 = arith.subf %0, %7 : vector<512x64xf32>
    %9 = arith.mulf %8, %8 : vector<512x64xf32>
    %cst_6 = arith.constant dense<0.000000e+00> : vector<512xf32>
    %10 = vector.multi_reduction <add>, %9, %cst_6 [1] : vector<512x64xf32> to vector<512xf32>
    %11 = vector.shape_cast %10 : vector<512xf32> to vector<512x1xf32>
    %cst_7 = arith.constant 6.400000e+01 : f32
    %12 = vector.broadcast %cst_7 : f32 to vector<512x1xf32>
    %13 = arith.divf %11, %12 : vector<512x1xf32>
    %14 = vector.broadcast %6 : vector<512x1xf32> to vector<512x64xf32>
    %15 = arith.subf %0, %14 : vector<512x64xf32>
    %cst_8 = arith.constant 9.99999974E-6 : f32
    %16 = vector.broadcast %cst_8 : f32 to vector<512x1xf32>
    %17 = arith.addf %13, %16 : vector<512x1xf32>
    %18 = math.rsqrt %17 : vector<512x1xf32>
    %19 = vector.broadcast %18 : vector<512x1xf32> to vector<512x64xf32>
    %20 = arith.mulf %15, %19 : vector<512x64xf32>
    %21 = vector.broadcast %1 : vector<1x64xf32> to vector<512x64xf32>
    %22 = arith.mulf %20, %21 : vector<512x64xf32>
    %23 = vector.broadcast %2 : vector<1x64xf32> to vector<512x64xf32>
    %24 = arith.addf %22, %23 : vector<512x64xf32>
    %c0_9 = arith.constant 0 : index
    %c0_10 = arith.constant 0 : index
    %25 = vector.load %arg4[%c0_9, %c0_10] : memref<64x64xf32, #tpu.memory_space<vmem>>, vector<64x64xf32>
    %cst_11 = arith.constant dense<0.000000e+00> : vector<512x64xf32>
    %26 = tpu.matmul %24, %25, %cst_11 {dimension_numbers = #tpu.dot_dimension_numbers<[1], [0], [0], [1], [0, 0, 1, 1], [], []>} : vector<512x64xf32>, vector<64x64xf32>, vector<512x64xf32> -> vector<512x64xf32>
    %c0_12 = arith.constant 0 : index
    %c0_13 = arith.constant 0 : index
    %27 = vector.load %arg5[%c0_12, %c0_13] : memref<1x64xf32, #tpu.memory_space<vmem>>, vector<1x64xf32>
    %28 = vector.broadcast %27 : vector<1x64xf32> to vector<512x64xf32>
    %29 = arith.addf %26, %28 : vector<512x64xf32>
    %c0_14 = arith.constant 0 : index
    %c0_15 = arith.constant 0 : index
    %30 = vector.load %arg6[%c0_14, %c0_15] : memref<64x64xf32, #tpu.memory_space<vmem>>, vector<64x64xf32>
    %cst_16 = arith.constant dense<0.000000e+00> : vector<512x64xf32>
    %31 = tpu.matmul %24, %30, %cst_16 {dimension_numbers = #tpu.dot_dimension_numbers<[1], [0], [0], [1], [0, 0, 1, 1], [], []>} : vector<512x64xf32>, vector<64x64xf32>, vector<512x64xf32> -> vector<512x64xf32>
    %c0_17 = arith.constant 0 : index
    %c0_18 = arith.constant 0 : index
    %32 = vector.load %arg7[%c0_17, %c0_18] : memref<1x64xf32, #tpu.memory_space<vmem>>, vector<1x64xf32>
    %33 = vector.broadcast %32 : vector<1x64xf32> to vector<512x64xf32>
    %34 = arith.addf %31, %33 : vector<512x64xf32>
    %c0_19 = arith.constant 0 : index
    %c0_20 = arith.constant 0 : index
    %35 = vector.load %arg8[%c0_19, %c0_20] : memref<64x64xf32, #tpu.memory_space<vmem>>, vector<64x64xf32>
    %cst_21 = arith.constant dense<0.000000e+00> : vector<512x64xf32>
    %36 = tpu.matmul %24, %35, %cst_21 {dimension_numbers = #tpu.dot_dimension_numbers<[1], [0], [0], [1], [0, 0, 1, 1], [], []>} : vector<512x64xf32>, vector<64x64xf32>, vector<512x64xf32> -> vector<512x64xf32>
    %c0_22 = arith.constant 0 : index
    %c0_23 = arith.constant 0 : index
    %37 = vector.load %arg9[%c0_22, %c0_23] : memref<1x64xf32, #tpu.memory_space<vmem>>, vector<1x64xf32>
    %38 = vector.broadcast %37 : vector<1x64xf32> to vector<512x64xf32>
    %39 = arith.addf %36, %38 : vector<512x64xf32>
    %cst_24 = arith.constant 2.500000e-01 : f32
    %40 = vector.broadcast %cst_24 : f32 to vector<512x64xf32>
    %41 = arith.mulf %29, %40 : vector<512x64xf32>
    %c0_25 = arith.constant 0 : index
    %c0_26 = arith.constant 0 : index
    %42 = vector.load %arg10[%c0_25, %c0_26] : memref<512x64xf32, #tpu.memory_space<vmem>>, vector<512x64xf32>
    tpu.vector_store %arg10[%c0_25, %c0_26], %41 {strides = array<i32>} : memref<512x64xf32, #tpu.memory_space<vmem>>, vector<512x64xf32>,
    %c0_27 = arith.constant 0 : index
    %c0_28 = arith.constant 0 : index
    %43 = vector.load %arg11[%c0_27, %c0_28] : memref<512x64xf32, #tpu.memory_space<vmem>>, vector<512x64xf32>
    tpu.vector_store %arg11[%c0_27, %c0_28], %34 {strides = array<i32>} : memref<512x64xf32, #tpu.memory_space<vmem>>, vector<512x64xf32>,
    %c0_29 = arith.constant 0 : index
    %c0_30 = arith.constant 0 : index
    %44 = vector.load %arg12[%c0_29, %c0_30] : memref<512x64xf32, #tpu.memory_space<vmem>>, vector<512x64xf32>
    tpu.vector_store %arg12[%c0_29, %c0_30], %39 {strides = array<i32>} : memref<512x64xf32, #tpu.memory_space<vmem>>, vector<512x64xf32>,
    return
  }
  func.func @transform_0(%arg0: i32) -> (i32, i32) {
    %c0_i32 = arith.constant 0 : i32
    %c0_i32_0 = arith.constant 0 : i32
    return %arg0, %c0_i32 : i32, i32
  }
  func.func @transform_1(%arg0: i32) -> (i32, i32) {
    %c0_i32 = arith.constant 0 : i32
    %c0_i32_0 = arith.constant 0 : i32
    %c0_i32_1 = arith.constant 0 : i32
    return %c0_i32, %c0_i32_0 : i32, i32
  }
  func.func @transform_2(%arg0: i32) -> (i32, i32) {
    %c0_i32 = arith.constant 0 : i32
    %c0_i32_0 = arith.constant 0 : i32
    %c0_i32_1 = arith.constant 0 : i32
    return %c0_i32, %c0_i32_0 : i32, i32
  }
  func.func @transform_3(%arg0: i32) -> (i32, i32) {
    %c0_i32 = arith.constant 0 : i32
    %c0_i32_0 = arith.constant 0 : i32
    %c0_i32_1 = arith.constant 0 : i32
    return %c0_i32, %c0_i32_0 : i32, i32
  }
  func.func @transform_4(%arg0: i32) -> (i32, i32) {
    %c0_i32 = arith.constant 0 : i32
    %c0_i32_0 = arith.constant 0 : i32
    %c0_i32_1 = arith.constant 0 : i32
    return %c0_i32, %c0_i32_0 : i32, i32
  }
  func.func @transform_5(%arg0: i32) -> (i32, i32) {
    %c0_i32 = arith.constant 0 : i32
    %c0_i32_0 = arith.constant 0 : i32
    %c0_i32_1 = arith.constant 0 : i32
    return %c0_i32, %c0_i32_0 : i32, i32
  }
  func.func @transform_6(%arg0: i32) -> (i32, i32) {
    %c0_i32 = arith.constant 0 : i32
    %c0_i32_0 = arith.constant 0 : i32
    %c0_i32_1 = arith.constant 0 : i32
    return %c0_i32, %c0_i32_0 : i32, i32
  }
  func.func @transform_7(%arg0: i32) -> (i32, i32) {
    %c0_i32 = arith.constant 0 : i32
    %c0_i32_0 = arith.constant 0 : i32
    %c0_i32_1 = arith.constant 0 : i32
    return %c0_i32, %c0_i32_0 : i32, i32
  }
  func.func @transform_8(%arg0: i32) -> (i32, i32) {
    %c0_i32 = arith.constant 0 : i32
    %c0_i32_0 = arith.constant 0 : i32
    %c0_i32_1 = arith.constant 0 : i32
    return %c0_i32, %c0_i32_0 : i32, i32
  }
  func.func @transform_9(%arg0: i32) -> (i32, i32) {
    %c0_i32 = arith.constant 0 : i32
    %c0_i32_0 = arith.constant 0 : i32
    return %arg0, %c0_i32 : i32, i32
  }
  func.func @transform_10(%arg0: i32) -> (i32, i32) {
    %c0_i32 = arith.constant 0 : i32
    %c0_i32_0 = arith.constant 0 : i32
    return %arg0, %c0_i32 : i32, i32
  }
  func.func @transform_11(%arg0: i32) -> (i32, i32) {
    %c0_i32 = arith.constant 0 : i32
    %c0_i32_0 = arith.constant 0 : i32
    return %arg0, %c0_i32 : i32, i32
  }
}

</mosaic_0001>

<llo_original>
// kernel: tpu_custom_call.1
$region0: #{tpu_custom_call.1}
  #allocation0 [shape = 'u32[]', space=smem, size = 0x4, offset = 0x4, fixed_abs, tag = 'smem constant byte address 0x4 - core index']
  #allocation1 [shape = 'u32[72,128]{1,0:T(1,128)}', space=vmem, size = 0x9000, scoped, tag = 'internal scratch']
  %s0 = inlined_call_operand.vmem [shape: f32[512,64], index: 0, kind: input, shape index: {}]
  %s1 = inlined_call_operand.vmem [shape: f32[1,64], index: 1, kind: input, shape index: {}]
  %s2 = inlined_call_operand.vmem [shape: f32[1,64], index: 2, kind: input, shape index: {}]
  %s3 = inlined_call_operand.vmem [shape: f32[64,64], index: 3, kind: input, shape index: {}]
  %s4 = inlined_call_operand.vmem [shape: f32[1,64], index: 4, kind: input, shape index: {}]
  %s5 = inlined_call_operand.vmem [shape: f32[64,64], index: 5, kind: input, shape index: {}]
  %s6 = inlined_call_operand.vmem [shape: f32[1,64], index: 6, kind: input, shape index: {}]
  %s7 = inlined_call_operand.vmem [shape: f32[64,64], index: 7, kind: input, shape index: {}]
  %s8 = inlined_call_operand.vmem [shape: f32[1,64], index: 8, kind: input, shape index: {}]
  %s9 = inlined_call_operand.vmem [shape: f32[512,64], index: 9, kind: output, shape index: {0}]
  %s10 = inlined_call_operand.vmem [shape: f32[512,64], index: 10, kind: output, shape index: {1}]
  %s11 = inlined_call_operand.vmem [shape: f32[512,64], index: 11, kind: output, shape index: {2}]
  %12 = xla_tuple %s9, %s10, %s11
  %s13 = sld [smem:[#allocation0]]
  $region62: #{tpu_custom_call.1} parent=0
    _
  %s15 = ssub.s32 1, %s13
  %s16 = scalar_select 0, %s15, %s13
  // Predicated region
  $region2: #{tpu_custom_call.1} parent=0 // pred_check
    _
  $region3: #{tpu_custom_call.1} parent=0 // pred_check_branch
    %18 = sbr.rel (0) target = $region5
  $region4: #{tpu_custom_call.1} parent=0 // pred_region
    _
  $region5: #{tpu_custom_call.1} parent=0 // pred_fallthru
    _
  // Predicated region
  $region6: #{tpu_custom_call.1} parent=0 // pred_check
    _
  $region7: #{tpu_custom_call.1} parent=0 // pred_check_branch
    %20 = sbr.rel (0) target = $region9
  $region8: #{tpu_custom_call.1} parent=0 // pred_region
    _
  $region9: #{tpu_custom_call.1} parent=0 // pred_fallthru
    _
  // Predicated region
  $region10: #{tpu_custom_call.1} parent=0 // pred_check
    _
  $region11: #{tpu_custom_call.1} parent=0 // pred_check_branch
    %22 = sbr.rel (0) target = $region13
  $region12: #{tpu_custom_call.1} parent=0 // pred_region
    _
  $region13: #{tpu_custom_call.1} parent=0 // pred_fallthru
    _
  // Predicated region
  $region14: #{tpu_custom_call.1} parent=0 // pred_check
    _
  $region15: #{tpu_custom_call.1} parent=0 // pred_check_branch
    %24 = sbr.rel (0) target = $region17
  $region16: #{tpu_custom_call.1} parent=0 // pred_region
    _
  $region17: #{tpu_custom_call.1} parent=0 // pred_fallthru
    _
  // Predicated region
  $region18: #{tpu_custom_call.1} parent=0 // pred_check
    _
  $region19: #{tpu_custom_call.1} parent=0 // pred_check_branch
    %26 = sbr.rel (0) target = $region21
  $region20: #{tpu_custom_call.1} parent=0 // pred_region
    _
  $region21: #{tpu_custom_call.1} parent=0 // pred_fallthru
    _
  // Predicated region
  $region22: #{tpu_custom_call.1} parent=0 // pred_check
    _
  $region23: #{tpu_custom_call.1} parent=0 // pred_check_branch
    %28 = sbr.rel (0) target = $region25
  $region24: #{tpu_custom_call.1} parent=0 // pred_region
    _
  $region25: #{tpu_custom_call.1} parent=0 // pred_fallthru
    _
  // Predicated region
  $region26: #{tpu_custom_call.1} parent=0 // pred_check
    _
  $region27: #{tpu_custom_call.1} parent=0 // pred_check_branch
    %30 = sbr.rel (0) target = $region29
  $region28: #{tpu_custom_call.1} parent=0 // pred_region
    _
  $region29: #{tpu_custom_call.1} parent=0 // pred_fallthru
    _
  // Predicated region
  $region30: #{tpu_custom_call.1} parent=0 // pred_check
    _
  $region31: #{tpu_custom_call.1} parent=0 // pred_check_branch
    %32 = sbr.rel (0) target = $region33
  $region32: #{tpu_custom_call.1} parent=0 // pred_region
    _
  $region33: #{tpu_custom_call.1} parent=0 // pred_fallthru
    _
  // Predicated region
  $region34: #{tpu_custom_call.1} parent=0 // pred_check
    _
  $region35: #{tpu_custom_call.1} parent=0 // pred_check_branch
    %34 = sbr.rel (0) target = $region37
  $region36: #{tpu_custom_call.1} parent=0 // pred_region
    _
  $region37: #{tpu_custom_call.1} parent=0 // pred_fallthru
    _
  %v35 = vld [vmem:[%s0] sm:$0xff]
  %v36 = vld [vmem:[%s0 + $0x8] sm:$0xff]
  %v37 = vld [vmem:[%s0 + $0x10] sm:$0xff]
  %v38 = vld [vmem:[%s0 + $0x18] sm:$0xff]
  %v39 = vld [vmem:[%s0 + $0x20] sm:$0xff]
  %v40 = vld [vmem:[%s0 + $0x28] sm:$0xff]
  %v41 = vld [vmem:[%s0 + $0x30] sm:$0xff]
  %v42 = vld [vmem:[%s0 + $0x38] sm:$0xff]
  %v43 = vld [vmem:[%s0 + $0x40] sm:$0xff]
  %v44 = vld [vmem:[%s0 + $0x48] sm:$0xff]
  %v45 = vld [vmem:[%s0 + $0x50] sm:$0xff]
  %v46 = vld [vmem:[%s0 + $0x58] sm:$0xff]
  %v47 = vld [vmem:[%s0 + $0x60] sm:$0xff]
  %v48 = vld [vmem:[%s0 + $0x68] sm:$0xff]
  %v49 = vld [vmem:[%s0 + $0x70] sm:$0xff]
  %v50 = vld [vmem:[%s0 + $0x78] sm:$0xff]
  %v51 = vld [vmem:[%s0 + $0x80] sm:$0xff]
  %v52 = vld [vmem:[%s0 + $0x88] sm:$0xff]
  %v53 = vld [vmem:[%s0 + $0x90] sm:$0xff]
  %v54 = vld [vmem:[%s0 + $0x98] sm:$0xff]
  %v55 = vld [vmem:[%s0 + $0xa0] sm:$0xff]
  %v56 = vld [vmem:[%s0 + $0xa8] sm:$0xff]
  %v57 = vld [vmem:[%s0 + $0xb0] sm:$0xff]
  %v58 = vld [vmem:[%s0 + $0xb8] sm:$0xff]
  %v59 = vld [vmem:[%s0 + $0xc0] sm:$0xff]
  %v60 = vld [vmem:[%s0 + $0xc8] sm:$0xff]
  %v61 = vld [vmem:[%s0 + $0xd0] sm:$0xff]
  %v62 = vld [vmem:[%s0 + $0xd8] sm:$0xff]
  %v63 = vld [vmem:[%s0 + $0xe0] sm:$0xff]
  %v64 = vld [vmem:[%s0 + $0xe8] sm:$0xff]
  %v65 = vld [vmem:[%s0 + $0xf0] sm:$0xff]
  %v66 = vld [vmem:[%s0 + $0xf8] sm:$0xff]
  %v67 = vld [vmem:[%s0 + $0x100] sm:$0xff]
  %v68 = vld [vmem:[%s0 + $0x108] sm:$0xff]
  %v69 = vld [vmem:[%s0 + $0x110] sm:$0xff]
  %v70 = vld [vmem:[%s0 + $0x118] sm:$0xff]
  %v71 = vld [vmem:[%s0 + $0x120] sm:$0xff]
  %v72 = vld [vmem:[%s0 + $0x128] sm:$0xff]
  %v73 = vld [vmem:[%s0 + $0x130] sm:$0xff]
  %v74 = vld [vmem:[%s0 + $0x138] sm:$0xff]
  %v75 = vld [vmem:[%s0 + $0x140] sm:$0xff]
  %v76 = vld [vmem:[%s0 + $0x148] sm:$0xff]
  %v77 = vld [vmem:[%s0 + $0x150] sm:$0xff]
  %v78 = vld [vmem:[%s0 + $0x158] sm:$0xff]
  %v79 = vld [vmem:[%s0 + $0x160] sm:$0xff]
  %v80 = vld [vmem:[%s0 + $0x168] sm:$0xff]
  %v81 = vld [vmem:[%s0 + $0x170] sm:$0xff]
  %v82 = vld [vmem:[%s0 + $0x178] sm:$0xff]
  %v83 = vld [vmem:[%s0 + $0x180] sm:$0xff]
  %v84 = vld [vmem:[%s0 + $0x188] sm:$0xff]
  %v85 = vld [vmem:[%s0 + $0x190] sm:$0xff]
  %v86 = vld [vmem:[%s0 + $0x198] sm:$0xff]
  %v87 = vld [vmem:[%s0 + $0x1a0] sm:$0xff]
  %v88 = vld [vmem:[%s0 + $0x1a8] sm:$0xff]
  %v89 = vld [vmem:[%s0 + $0x1b0] sm:$0xff]
  %v90 = vld [vmem:[%s0 + $0x1b8] sm:$0xff]
  %v91 = vld [vmem:[%s0 + $0x1c0] sm:$0xff]
  %v92 = vld [vmem:[%s0 + $0x1c8] sm:$0xff]
  %v93 = vld [vmem:[%s0 + $0x1d0] sm:$0xff]
  %v94 = vld [vmem:[%s0 + $0x1d8] sm:$0xff]
  %v95 = vld [vmem:[%s0 + $0x1e0] sm:$0xff]
  %v96 = vld [vmem:[%s0 + $0x1e8] sm:$0xff]
  %v97 = vld [vmem:[%s0 + $0x1f0] sm:$0xff]
  %v98 = vld [vmem:[%s0 + $0x1f8] sm:$0xff]
  %v99 = vld [vmem:[%s1] sm:$0x1]
  %v100 = vld [vmem:[%s2] sm:$0x1]
  %vm101 = vcmask 523264
  %v102 = vsel %vm101, %v35, 0.0
  %103 = vadd.xlane.f32.xlu0 %v102
  %v104 = vpop.xlane.xlu0 %103
  %v105 = vsel %vm101, %v36, 0.0
  %106 = vadd.xlane.f32.xlu0 %v105
  %v107 = vpop.xlane.xlu0 %106
  %v108 = vsel %vm101, %v37, 0.0
  %109 = vadd.xlane.f32.xlu0 %v108
  %v110 = vpop.xlane.xlu0 %109
  %v111 = vsel %vm101, %v38, 0.0
  %112 = vadd.xlane.f32.xlu0 %v111
  %v113 = vpop.xlane.xlu0 %112
  %v114 = vsel %vm101, %v39, 0.0
  %115 = vadd.xlane.f32.xlu0 %v114
  %v116 = vpop.xlane.xlu0 %115
  %v117 = vsel %vm101, %v40, 0.0
  %118 = vadd.xlane.f32.xlu0 %v117
  %v119 = vpop.xlane.xlu0 %118
  %v120 = vsel %vm101, %v41, 0.0
  %121 = vadd.xlane.f32.xlu0 %v120
  %v122 = vpop.xlane.xlu0 %121
  %v123 = vsel %vm101, %v42, 0.0
  %124 = vadd.xlane.f32.xlu0 %v123
  %v125 = vpop.xlane.xlu0 %124
  %v126 = vsel %vm101, %v43, 0.0
  %127 = vadd.xlane.f32.xlu0 %v126
  %v128 = vpop.xlane.xlu0 %127
  %v129 = vsel %vm101, %v44, 0.0
  %130 = vadd.xlane.f32.xlu0 %v129
  %v131 = vpop.xlane.xlu0 %130
  %v132 = vsel %vm101, %v45, 0.0
  %133 = vadd.xlane.f32.xlu0 %v132
  %v134 = vpop.xlane.xlu0 %133
  %v135 = vsel %vm101, %v46, 0.0
  %136 = vadd.xlane.f32.xlu0 %v135
  %v137 = vpop.xlane.xlu0 %136
  %v138 = vsel %vm101, %v47, 0.0
  %139 = vadd.xlane.f32.xlu0 %v138
  %v140 = vpop.xlane.xlu0 %139
  %v141 = vsel %vm101, %v48, 0.0
  %142 = vadd.xlane.f32.xlu0 %v141
  %v143 = vpop.xlane.xlu0 %142
  %v144 = vsel %vm101, %v49, 0.0
  %145 = vadd.xlane.f32.xlu0 %v144
  %v146 = vpop.xlane.xlu0 %145
  %v147 = vsel %vm101, %v50, 0.0
  %148 = vadd.xlane.f32.xlu0 %v147
  %v149 = vpop.xlane.xlu0 %148
  %v150 = vsel %vm101, %v51, 0.0
  %151 = vadd.xlane.f32.xlu0 %v150
  %v152 = vpop.xlane.xlu0 %151
  %v153 = vsel %vm101, %v52, 0.0
  %154 = vadd.xlane.f32.xlu0 %v153
  %v155 = vpop.xlane.xlu0 %154
  %v156 = vsel %vm101, %v53, 0.0
  %157 = vadd.xlane.f32.xlu0 %v156
  %v158 = vpop.xlane.xlu0 %157
  %v159 = vsel %vm101, %v54, 0.0
  %160 = vadd.xlane.f32.xlu0 %v159
  %v161 = vpop.xlane.xlu0 %160
  %v162 = vsel %vm101, %v55, 0.0
  %163 = vadd.xlane.f32.xlu0 %v162
  %v164 = vpop.xlane.xlu0 %163
  %v165 = vsel %vm101, %v56, 0.0
  %166 = vadd.xlane.f32.xlu0 %v165
  %v167 = vpop.xlane.xlu0 %166
  %v168 = vsel %vm101, %v57, 0.0
  %169 = vadd.xlane.f32.xlu0 %v168
  %v170 = vpop.xlane.xlu0 %169
  %v171 = vsel %vm101, %v58, 0.0
  %172 = vadd.xlane.f32.xlu0 %v171
  %v173 = vpop.xlane.xlu0 %172
  %v174 = vsel %vm101, %v59, 0.0
  %175 = vadd.xlane.f32.xlu0 %v174
  %v176 = vpop.xlane.xlu0 %175
  %v177 = vsel %vm101, %v60, 0.0
  %178 = vadd.xlane.f32.xlu0 %v177
  %v179 = vpop.xlane.xlu0 %178
  %v180 = vsel %vm101, %v61, 0.0
  %181 = vadd.xlane.f32.xlu0 %v180
  %v182 = vpop.xlane.xlu0 %181
  %v183 = vsel %vm101, %v62, 0.0
  %184 = vadd.xlane.f32.xlu0 %v183
  %v185 = vpop.xlane.xlu0 %184
  %v186 = vsel %vm101, %v63, 0.0
  %187 = vadd.xlane.f32.xlu0 %v186
  %v188 = vpop.xlane.xlu0 %187
  %v189 = vsel %vm101, %v64, 0.0
  %190 = vadd.xlane.f32.xlu0 %v189
  %v191 = vpop.xlane.xlu0 %190
  %v192 = vsel %vm101, %v65, 0.0
  %193 = vadd.xlane.f32.xlu0 %v192
  %v194 = vpop.xlane.xlu0 %193
  %v195 = vsel %vm101, %v66, 0.0
  %196 = vadd.xlane.f32.xlu0 %v195
  %v197 = vpop.xlane.xlu0 %196
  %v198 = vsel %vm101, %v67, 0.0
  %199 = vadd.xlane.f32.xlu0 %v198
  %v200 = vpop.xlane.xlu0 %199
  %v201 = vsel %vm101, %v68, 0.0
  %202 = vadd.xlane.f32.xlu0 %v201
  %v203 = vpop.xlane.xlu0 %202
  %v204 = vsel %vm101, %v69, 0.0
  %205 = vadd.xlane.f32.xlu0 %v204
  %v206 = vpop.xlane.xlu0 %205
  %v207 = vsel %vm101, %v70, 0.0
  %208 = vadd.xlane.f32.xlu0 %v207
  %v209 = vpop.xlane.xlu0 %208
  %v210 = vsel %vm101, %v71, 0.0
  %211 = vadd.xlane.f32.xlu0 %v210
  %v212 = vpop.xlane.xlu0 %211
  %v213 = vsel %vm101, %v72, 0.0
  %214 = vadd.xlane.f32.xlu0 %v213
  %v215 = vpop.xlane.xlu0 %214
  %v216 = vsel %vm101, %v73, 0.0
  %217 = vadd.xlane.f32.xlu0 %v216
  %v218 = vpop.xlane.xlu0 %217
  %v219 = vsel %vm101, %v74, 0.0
  %220 = vadd.xlane.f32.xlu0 %v219
  %v221 = vpop.xlane.xlu0 %220
  %v222 = vsel %vm101, %v75, 0.0
  %223 = vadd.xlane.f32.xlu0 %v222
  %v224 = vpop.xlane.xlu0 %223
  %v225 = vsel %vm101, %v76, 0.0
  %226 = vadd.xlane.f32.xlu0 %v225
  %v227 = vpop.xlane.xlu0 %226
  %v228 = vsel %vm101, %v77, 0.0
  %229 = vadd.xlane.f32.xlu0 %v228
  %v230 = vpop.xlane.xlu0 %229
  %v231 = vsel %vm101, %v78, 0.0
  %232 = vadd.xlane.f32.xlu0 %v231
  %v233 = vpop.xlane.xlu0 %232
  %v234 = vsel %vm101, %v79, 0.0
  %235 = vadd.xlane.f32.xlu0 %v234
  %v236 = vpop.xlane.xlu0 %235
  %v237 = vsel %vm101, %v80, 0.0
  %238 = vadd.xlane.f32.xlu0 %v237
  %v239 = vpop.xlane.xlu0 %238
  %v240 = vsel %vm101, %v81, 0.0
  %241 = vadd.xlane.f32.xlu0 %v240
  %v242 = vpop.xlane.xlu0 %241
  %v243 = vsel %vm101, %v82, 0.0
  %244 = vadd.xlane.f32.xlu0 %v243
  %v245 = vpop.xlane.xlu0 %244
  %v246 = vsel %vm101, %v83, 0.0
  %247 = vadd.xlane.f32.xlu0 %v246
  %v248 = vpop.xlane.xlu0 %247
  %v249 = vsel %vm101, %v84, 0.0
  %250 = vadd.xlane.f32.xlu0 %v249
  %v251 = vpop.xlane.xlu0 %250
  %v252 = vsel %vm101, %v85, 0.0
  %253 = vadd.xlane.f32.xlu0 %v252
  %v254 = vpop.xlane.xlu0 %253
  %v255 = vsel %vm101, %v86, 0.0
  %256 = vadd.xlane.f32.xlu0 %v255
  %v257 = vpop.xlane.xlu0 %256
  %v258 = vsel %vm101, %v87, 0.0
  %259 = vadd.xlane.f32.xlu0 %v258
  %v260 = vpop.xlane.xlu0 %259
  %v261 = vsel %vm101, %v88, 0.0
  %262 = vadd.xlane.f32.xlu0 %v261
  %v263 = vpop.xlane.xlu0 %262
  %v264 = vsel %vm101, %v89, 0.0
  %265 = vadd.xlane.f32.xlu0 %v264
  %v266 = vpop.xlane.xlu0 %265
  %v267 = vsel %vm101, %v90, 0.0
  %268 = vadd.xlane.f32.xlu0 %v267
  %v269 = vpop.xlane.xlu0 %268
  %v270 = vsel %vm101, %v91, 0.0
  %271 = vadd.xlane.f32.xlu0 %v270
  %v272 = vpop.xlane.xlu0 %271
  %v273 = vsel %vm101, %v92, 0.0
  %274 = vadd.xlane.f32.xlu0 %v273
  %v275 = vpop.xlane.xlu0 %274
  %v276 = vsel %vm101, %v93, 0.0
  %277 = vadd.xlane.f32.xlu0 %v276
  %v278 = vpop.xlane.xlu0 %277
  %v279 = vsel %vm101, %v94, 0.0
  %280 = vadd.xlane.f32.xlu0 %v279
  %v281 = vpop.xlane.xlu0 %280
  %v282 = vsel %vm101, %v95, 0.0
  %283 = vadd.xlane.f32.xlu0 %v282
  %v284 = vpop.xlane.xlu0 %283
  %v285 = vsel %vm101, %v96, 0.0
  %286 = vadd.xlane.f32.xlu0 %v285
  %v287 = vpop.xlane.xlu0 %286
  %v288 = vsel %vm101, %v97, 0.0
  %289 = vadd.xlane.f32.xlu0 %v288
  %v290 = vpop.xlane.xlu0 %289
  %v291 = vsel %vm101, %v98, 0.0
  %292 = vadd.xlane.f32.xlu0 %v291
  %v293 = vpop.xlane.xlu0 %292
  %v294 = vrcp.pop 64.0
  %v295 = vmul.f32 64.0, %v294
  %v296 = vsub.f32 1.0, %v295
  %v297 = vmul.f32 %v294, %v296
  %v298 = vadd.f32 %v294, %v297
  %vm299 = vweird.f32 %v294
  %v300 = vsel %vm299, %v294, %v298
  %v301 = vmul.f32 %v104, %v300
  %v302 = vmul.f32 %v107, %v300
  %v303 = vmul.f32 %v110, %v300
  %v304 = vmul.f32 %v113, %v300
  %v305 = vmul.f32 %v116, %v300
  %v306 = vmul.f32 %v119, %v300
  %v307 = vmul.f32 %v122, %v300
  %v308 = vmul.f32 %v125, %v300
  %v309 = vmul.f32 %v128, %v300
  %v310 = vmul.f32 %v131, %v300
  %v311 = vmul.f32 %v134, %v300
  %v312 = vmul.f32 %v137, %v300
  %v313 = vmul.f32 %v140, %v300
  %v314 = vmul.f32 %v143, %v300
  %v315 = vmul.f32 %v146, %v300
  %v316 = vmul.f32 %v149, %v300
  %v317 = vmul.f32 %v152, %v300
  %v318 = vmul.f32 %v155, %v300
  %v319 = vmul.f32 %v158, %v300
  %v320 = vmul.f32 %v161, %v300
  %v321 = vmul.f32 %v164, %v300
  %v322 = vmul.f32 %v167, %v300
  %v323 = vmul.f32 %v170, %v300
  %v324 = vmul.f32 %v173, %v300
  %v325 = vmul.f32 %v176, %v300
  %v326 = vmul.f32 %v179, %v300
  %v327 = vmul.f32 %v182, %v300
  %v328 = vmul.f32 %v185, %v300
  %v329 = vmul.f32 %v188, %v300
  %v330 = vmul.f32 %v191, %v300
  %v331 = vmul.f32 %v194, %v300
  %v332 = vmul.f32 %v197, %v300
  %v333 = vmul.f32 %v200, %v300
  %v334 = vmul.f32 %v203, %v300
  %v335 = vmul.f32 %v206, %v300
  %v336 = vmul.f32 %v209, %v300
  %v337 = vmul.f32 %v212, %v300
  %v338 = vmul.f32 %v215, %v300
  %v339 = vmul.f32 %v218, %v300
  %v340 = vmul.f32 %v221, %v300
  %v341 = vmul.f32 %v224, %v300
  %v342 = vmul.f32 %v227, %v300
  %v343 = vmul.f32 %v230, %v300
  %v344 = vmul.f32 %v233, %v300
  %v345 = vmul.f32 %v236, %v300
  %v346 = vmul.f32 %v239, %v300
  %v347 = vmul.f32 %v242, %v300
  %v348 = vmul.f32 %v245, %v300
  %v349 = vmul.f32 %v248, %v300
  %v350 = vmul.f32 %v251, %v300
  %v351 = vmul.f32 %v254, %v300
  %v352 = vmul.f32 %v257, %v300
  %v353 = vmul.f32 %v260, %v300
  %v354 = vmul.f32 %v263, %v300
  %v355 = vmul.f32 %v266, %v300
  %v356 = vmul.f32 %v269, %v300
  %v357 = vmul.f32 %v272, %v300
  %v358 = vmul.f32 %v275, %v300
  %v359 = vmul.f32 %v278, %v300
  %v360 = vmul.f32 %v281, %v300
  %v361 = vmul.f32 %v284, %v300
  %v362 = vmul.f32 %v287, %v300
  %v363 = vmul.f32 %v290, %v300
  %v364 = vmul.f32 %v293, %v300
  %v365 = vsub.f32 %v35, %v301
  %v366 = vsub.f32 %v36, %v302
  %v367 = vsub.f32 %v37, %v303
  %v368 = vsub.f32 %v38, %v304
  %v369 = vsub.f32 %v39, %v305
  %v370 = vsub.f32 %v40, %v306
  %v371 = vsub.f32 %v41, %v307
  %v372 = vsub.f32 %v42, %v308
  %v373 = vsub.f32 %v43, %v309
  %v374 = vsub.f32 %v44, %v310
  %v375 = vsub.f32 %v45, %v311
  %v376 = vsub.f32 %v46, %v312
  %v377 = vsub.f32 %v47, %v313
  %v378 = vsub.f32 %v48, %v314
  %v379 = vsub.f32 %v49, %v315
  %v380 = vsub.f32 %v50, %v316
  %v381 = vsub.f32 %v51, %v317
  %v382 = vsub.f32 %v52, %v318
  %v383 = vsub.f32 %v53, %v319
  %v384 = vsub.f32 %v54, %v320
  %v385 = vsub.f32 %v55, %v321
  %v386 = vsub.f32 %v56, %v322
  %v387 = vsub.f32 %v57, %v323
  %v388 = vsub.f32 %v58, %v324
  %v389 = vsub.f32 %v59, %v325
  %v390 = vsub.f32 %v60, %v326
  %v391 = vsub.f32 %v61, %v327
  %v392 = vsub.f32 %v62, %v328
  %v393 = vsub.f32 %v63, %v329
  %v394 = vsub.f32 %v64, %v330
  %v395 = vsub.f32 %v65, %v331
  %v396 = vsub.f32 %v66, %v332
  %v397 = vsub.f32 %v67, %v333
  %v398 = vsub.f32 %v68, %v334
  %v399 = vsub.f32 %v69, %v335
  %v400 = vsub.f32 %v70, %v336
  %v401 = vsub.f32 %v71, %v337
  %v402 = vsub.f32 %v72, %v338
  %v403 = vsub.f32 %v73, %v339
  %v404 = vsub.f32 %v74, %v340
  %v405 = vsub.f32 %v75, %v341
  %v406 = vsub.f32 %v76, %v342
  %v407 = vsub.f32 %v77, %v343
  %v408 = vsub.f32 %v78, %v344
  %v409 = vsub.f32 %v79, %v345
  %v410 = vsub.f32 %v80, %v346
  %v411 = vsub.f32 %v81, %v347
  %v412 = vsub.f32 %v82, %v348
  %v413 = vsub.f32 %v83, %v349
  %v414 = vsub.f32 %v84, %v350
  %v415 = vsub.f32 %v85, %v351
  %v416 = vsub.f32 %v86, %v352
  %v417 = vsub.f32 %v87, %v353
  %v418 = vsub.f32 %v88, %v354
  %v419 = vsub.f32 %v89, %v355
  %v420 = vsub.f32 %v90, %v356
  %v421 = vsub.f32 %v91, %v357
  %v422 = vsub.f32 %v92, %v358
  %v423 = vsub.f32 %v93, %v359
  %v424 = vsub.f32 %v94, %v360
  %v425 = vsub.f32 %v95, %v361
  %v426 = vsub.f32 %v96, %v362
  %v427 = vsub.f32 %v97, %v363
  %v428 = vsub.f32 %v98, %v364
  %v429 = vmul.f32 %v365, %v365
  %v430 = vmul.f32 %v366, %v366
  %v431 = vmul.f32 %v367, %v367
  %v432 = vmul.f32 %v368, %v368
  %v433 = vmul.f32 %v369, %v369
  %v434 = vmul.f32 %v370, %v370
  %v435 = vmul.f32 %v371, %v371
  %v436 = vmul.f32 %v372, %v372
  %v437 = vmul.f32 %v373, %v373
  %v438 = vmul.f32 %v374, %v374
  %v439 = vmul.f32 %v375, %v375
  %v440 = vmul.f32 %v376, %v376
  %v441 = vmul.f32 %v377, %v377
  %v442 = vmul.f32 %v378, %v378
  %v443 = vmul.f32 %v379, %v379
  %v444 = vmul.f32 %v380, %v380
  %v445 = vmul.f32 %v381, %v381
  %v446 = vmul.f32 %v382, %v382
  %v447 = vmul.f32 %v383, %v383
  %v448 = vmul.f32 %v384, %v384
  %v449 = vmul.f32 %v385, %v385
  %v450 = vmul.f32 %v386, %v386
  %v451 = vmul.f32 %v387, %v387
  %v452 = vmul.f32 %v388, %v388
  %v453 = vmul.f32 %v389, %v389
  %v454 = vmul.f32 %v390, %v390
  %v455 = vmul.f32 %v391, %v391
  %v456 = vmul.f32 %v392, %v392
  %v457 = vmul.f32 %v393, %v393
  %v458 = vmul.f32 %v394, %v394
  %v459 = vmul.f32 %v395, %v395
  %v460 = vmul.f32 %v396, %v396
  %v461 = vmul.f32 %v397, %v397
  %v462 = vmul.f32 %v398, %v398
  %v463 = vmul.f32 %v399, %v399
  %v464 = vmul.f32 %v400, %v400
  %v465 = vmul.f32 %v401, %v401
  %v466 = vmul.f32 %v402, %v402
  %v467 = vmul.f32 %v403, %v403
  %v468 = vmul.f32 %v404, %v404
  %v469 = vmul.f32 %v405, %v405
  %v470 = vmul.f32 %v406, %v406
  %v471 = vmul.f32 %v407, %v407
  %v472 = vmul.f32 %v408, %v408
  %v473 = vmul.f32 %v409, %v409
  %v474 = vmul.f32 %v410, %v410
  %v475 = vmul.f32 %v411, %v411
  %v476 = vmul.f32 %v412, %v412
  %v477 = vmul.f32 %v413, %v413
  %v478 = vmul.f32 %v414, %v414
  %v479 = vmul.f32 %v415, %v415
  %v480 = vmul.f32 %v416, %v416
  %v481 = vmul.f32 %v417, %v417
  %v482 = vmul.f32 %v418, %v418
  %v483 = vmul.f32 %v419, %v419
  %v484 = vmul.f32 %v420, %v420
  %v485 = vmul.f32 %v421, %v421
  %v486 = vmul.f32 %v422, %v422
  %v487 = vmul.f32 %v423, %v423
  %v488 = vmul.f32 %v424, %v424
  %v489 = vmul.f32 %v425, %v425
  %v490 = vmul.f32 %v426, %v426
  %v491 = vmul.f32 %v427, %v427
  %v492 = vmul.f32 %v428, %v428
  %v493 = vsel %vm101, %v429, 0.0
  %494 = vadd.xlane.f32.xlu0 %v493
  %v495 = vpop.xlane.xlu0 %494
  %v496 = vsel %vm101, %v430, 0.0
  %497 = vadd.xlane.f32.xlu0 %v496
  %v498 = vpop.xlane.xlu0 %497
  %v499 = vsel %vm101, %v431, 0.0
  %500 = vadd.xlane.f32.xlu0 %v499
  %v501 = vpop.xlane.xlu0 %500
  %v502 = vsel %vm101, %v432, 0.0
  %503 = vadd.xlane.f32.xlu0 %v502
  %v504 = vpop.xlane.xlu0 %503
  %v505 = vsel %vm101, %v433, 0.0
  %506 = vadd.xlane.f32.xlu0 %v505
  %v507 = vpop.xlane.xlu0 %506
  %v508 = vsel %vm101, %v434, 0.0
  %509 = vadd.xlane.f32.xlu0 %v508
  %v510 = vpop.xlane.xlu0 %509
  %v511 = vsel %vm101, %v435, 0.0
  %512 = vadd.xlane.f32.xlu0 %v511
  %v513 = vpop.xlane.xlu0 %512
  %v514 = vsel %vm101, %v436, 0.0
  %515 = vadd.xlane.f32.xlu0 %v514
  %v516 = vpop.xlane.xlu0 %515
  %v517 = vsel %vm101, %v437, 0.0
  %518 = vadd.xlane.f32.xlu0 %v517
  %v519 = vpop.xlane.xlu0 %518
  %v520 = vsel %vm101, %v438, 0.0
  %521 = vadd.xlane.f32.xlu0 %v520
  %v522 = vpop.xlane.xlu0 %521
  %v523 = vsel %vm101, %v439, 0.0
  %524 = vadd.xlane.f32.xlu0 %v523
  %v525 = vpop.xlane.xlu0 %524
  %v526 = vsel %vm101, %v440, 0.0
  %527 = vadd.xlane.f32.xlu0 %v526
  %v528 = vpop.xlane.xlu0 %527
  %v529 = vsel %vm101, %v441, 0.0
  %530 = vadd.xlane.f32.xlu0 %v529
  %v531 = vpop.xlane.xlu0 %530
  %v532 = vsel %vm101, %v442, 0.0
  %533 = vadd.xlane.f32.xlu0 %v532
  %v534 = vpop.xlane.xlu0 %533
  %v535 = vsel %vm101, %v443, 0.0
  %536 = vadd.xlane.f32.xlu0 %v535
  %v537 = vpop.xlane.xlu0 %536
  %v538 = vsel %vm101, %v444, 0.0
  %539 = vadd.xlane.f32.xlu0 %v538
  %v540 = vpop.xlane.xlu0 %539
  %v541 = vsel %vm101, %v445, 0.0
  %542 = vadd.xlane.f32.xlu0 %v541
  %v543 = vpop.xlane.xlu0 %542
  %v544 = vsel %vm101, %v446, 0.0
  %545 = vadd.xlane.f32.xlu0 %v544
  %v546 = vpop.xlane.xlu0 %545
  %v547 = vsel %vm101, %v447, 0.0
  %548 = vadd.xlane.f32.xlu0 %v547
  %v549 = vpop.xlane.xlu0 %548
  %v550 = vsel %vm101, %v448, 0.0
  %551 = vadd.xlane.f32.xlu0 %v550
  %v552 = vpop.xlane.xlu0 %551
  %v553 = vsel %vm101, %v449, 0.0
  %554 = vadd.xlane.f32.xlu0 %v553
  %v555 = vpop.xlane.xlu0 %554
  %v556 = vsel %vm101, %v450, 0.0
  %557 = vadd.xlane.f32.xlu0 %v556
  %v558 = vpop.xlane.xlu0 %557
  %v559 = vsel %vm101, %v451, 0.0
  %560 = vadd.xlane.f32.xlu0 %v559
  %v561 = vpop.xlane.xlu0 %560
  %v562 = vsel %vm101, %v452, 0.0
  %563 = vadd.xlane.f32.xlu0 %v562
  %v564 = vpop.xlane.xlu0 %563
  %v565 = vsel %vm101, %v453, 0.0
  %566 = vadd.xlane.f32.xlu0 %v565
  %v567 = vpop.xlane.xlu0 %566
  %v568 = vsel %vm101, %v454, 0.0
  %569 = vadd.xlane.f32.xlu0 %v568
  %v570 = vpop.xlane.xlu0 %569
  %v571 = vsel %vm101, %v455, 0.0
  %572 = vadd.xlane.f32.xlu0 %v571
  %v573 = vpop.xlane.xlu0 %572
  %v574 = vsel %vm101, %v456, 0.0
  %575 = vadd.xlane.f32.xlu0 %v574
  %v576 = vpop.xlane.xlu0 %575
  %v577 = vsel %vm101, %v457, 0.0
  %578 = vadd.xlane.f32.xlu0 %v577
  %v579 = vpop.xlane.xlu0 %578
  %v580 = vsel %vm101, %v458, 0.0
  %581 = vadd.xlane.f32.xlu0 %v580
  %v582 = vpop.xlane.xlu0 %581
  %v583 = vsel %vm101, %v459, 0.0
  %584 = vadd.xlane.f32.xlu0 %v583
  %v585 = vpop.xlane.xlu0 %584
  %v586 = vsel %vm101, %v460, 0.0
  %587 = vadd.xlane.f32.xlu0 %v586
  %v588 = vpop.xlane.xlu0 %587
  %v589 = vsel %vm101, %v461, 0.0
  %590 = vadd.xlane.f32.xlu0 %v589
  %v591 = vpop.xlane.xlu0 %590
  %v592 = vsel %vm101, %v462, 0.0
  %593 = vadd.xlane.f32.xlu0 %v592
  %v594 = vpop.xlane.xlu0 %593
  %v595 = vsel %vm101, %v463, 0.0
  %596 = vadd.xlane.f32.xlu0 %v595
  %v597 = vpop.xlane.xlu0 %596
  %v598 = vsel %vm101, %v464, 0.0
  %599 = vadd.xlane.f32.xlu0 %v598
  %v600 = vpop.xlane.xlu0 %599
  %v601 = vsel %vm101, %v465, 0.0
  %602 = vadd.xlane.f32.xlu0 %v601
  %v603 = vpop.xlane.xlu0 %602
  %v604 = vsel %vm101, %v466, 0.0
  %605 = vadd.xlane.f32.xlu0 %v604
  %v606 = vpop.xlane.xlu0 %605
  %v607 = vsel %vm101, %v467, 0.0
  %608 = vadd.xlane.f32.xlu0 %v607
  %v609 = vpop.xlane.xlu0 %608
  %v610 = vsel %vm101, %v468, 0.0
  %611 = vadd.xlane.f32.xlu0 %v610
  %v612 = vpop.xlane.xlu0 %611
  %v613 = vsel %vm101, %v469, 0.0
  %614 = vadd.xlane.f32.xlu0 %v613
  %v615 = vpop.xlane.xlu0 %614
  %v616 = vsel %vm101, %v470, 0.0
  %617 = vadd.xlane.f32.xlu0 %v616
  %v618 = vpop.xlane.xlu0 %617
  %v619 = vsel %vm101, %v471, 0.0
  %620 = vadd.xlane.f32.xlu0 %v619
  %v621 = vpop.xlane.xlu0 %620
  %v622 = vsel %vm101, %v472, 0.0
  %623 = vadd.xlane.f32.xlu0 %v622
  %v624 = vpop.xlane.xlu0 %623
  %v625 = vsel %vm101, %v473, 0.0
  %626 = vadd.xlane.f32.xlu0 %v625
  %v627 = vpop.xlane.xlu0 %626
  %v628 = vsel %vm101, %v474, 0.0
  %629 = vadd.xlane.f32.xlu0 %v628
  %v630 = vpop.xlane.xlu0 %629
  %v631 = vsel %vm101, %v475, 0.0
  %632 = vadd.xlane.f32.xlu0 %v631
  %v633 = vpop.xlane.xlu0 %632
  %v634 = vsel %vm101, %v476, 0.0
  %635 = vadd.xlane.f32.xlu0 %v634
  %v636 = vpop.xlane.xlu0 %635
  %v637 = vsel %vm101, %v477, 0.0
  %638 = vadd.xlane.f32.xlu0 %v637
  %v639 = vpop.xlane.xlu0 %638
  %v640 = vsel %vm101, %v478, 0.0
  %641 = vadd.xlane.f32.xlu0 %v640
  %v642 = vpop.xlane.xlu0 %641
  %v643 = vsel %vm101, %v479, 0.0
  %644 = vadd.xlane.f32.xlu0 %v643
  %v645 = vpop.xlane.xlu0 %644
  %v646 = vsel %vm101, %v480, 0.0
  %647 = vadd.xlane.f32.xlu0 %v646
  %v648 = vpop.xlane.xlu0 %647
  %v649 = vsel %vm101, %v481, 0.0
  %650 = vadd.xlane.f32.xlu0 %v649
  %v651 = vpop.xlane.xlu0 %650
  %v652 = vsel %vm101, %v482, 0.0
  %653 = vadd.xlane.f32.xlu0 %v652
  %v654 = vpop.xlane.xlu0 %653
  %v655 = vsel %vm101, %v483, 0.0
  %656 = vadd.xlane.f32.xlu0 %v655
  %v657 = vpop.xlane.xlu0 %656
  %v658 = vsel %vm101, %v484, 0.0
  %659 = vadd.xlane.f32.xlu0 %v658
  %v660 = vpop.xlane.xlu0 %659
  %v661 = vsel %vm101, %v485, 0.0
  %662 = vadd.xlane.f32.xlu0 %v661
  %v663 = vpop.xlane.xlu0 %662
  %v664 = vsel %vm101, %v486, 0.0
  %665 = vadd.xlane.f32.xlu0 %v664
  %v666 = vpop.xlane.xlu0 %665
  %v667 = vsel %vm101, %v487, 0.0
  %668 = vadd.xlane.f32.xlu0 %v667
  %v669 = vpop.xlane.xlu0 %668
  %v670 = vsel %vm101, %v488, 0.0
  %671 = vadd.xlane.f32.xlu0 %v670
  %v672 = vpop.xlane.xlu0 %671
  %v673 = vsel %vm101, %v489, 0.0
  %674 = vadd.xlane.f32.xlu0 %v673
  %v675 = vpop.xlane.xlu0 %674
  %v676 = vsel %vm101, %v490, 0.0
  %677 = vadd.xlane.f32.xlu0 %v676
  %v678 = vpop.xlane.xlu0 %677
  %v679 = vsel %vm101, %v491, 0.0
  %680 = vadd.xlane.f32.xlu0 %v679
  %v681 = vpop.xlane.xlu0 %680
  %v682 = vsel %vm101, %v492, 0.0
  %683 = vadd.xlane.f32.xlu0 %v682
  %v684 = vpop.xlane.xlu0 %683
  %v685 = vmul.f32 %v495, %v300
  %v686 = vmul.f32 %v498, %v300
  %v687 = vmul.f32 %v501, %v300
  %v688 = vmul.f32 %v504, %v300
  %v689 = vmul.f32 %v507, %v300
  %v690 = vmul.f32 %v510, %v300
  %v691 = vmul.f32 %v513, %v300
  %v692 = vmul.f32 %v516, %v300
  %v693 = vmul.f32 %v519, %v300
  %v694 = vmul.f32 %v522, %v300
  %v695 = vmul.f32 %v525, %v300
  %v696 = vmul.f32 %v528, %v300
  %v697 = vmul.f32 %v531, %v300
  %v698 = vmul.f32 %v534, %v300
  %v699 = vmul.f32 %v537, %v300
  %v700 = vmul.f32 %v540, %v300
  %v701 = vmul.f32 %v543, %v300
  %v702 = vmul.f32 %v546, %v300
  %v703 = vmul.f32 %v549, %v300
  %v704 = vmul.f32 %v552, %v300
  %v705 = vmul.f32 %v555, %v300
  %v706 = vmul.f32 %v558, %v300
  %v707 = vmul.f32 %v561, %v300
  %v708 = vmul.f32 %v564, %v300
  %v709 = vmul.f32 %v567, %v300
  %v710 = vmul.f32 %v570, %v300
  %v711 = vmul.f32 %v573, %v300
  %v712 = vmul.f32 %v576, %v300
  %v713 = vmul.f32 %v579, %v300
  %v714 = vmul.f32 %v582, %v300
  %v715 = vmul.f32 %v585, %v300
  %v716 = vmul.f32 %v588, %v300
  %v717 = vmul.f32 %v591, %v300
  %v718 = vmul.f32 %v594, %v300
  %v719 = vmul.f32 %v597, %v300
  %v720 = vmul.f32 %v600, %v300
  %v721 = vmul.f32 %v603, %v300
  %v722 = vmul.f32 %v606, %v300
  %v723 = vmul.f32 %v609, %v300
  %v724 = vmul.f32 %v612, %v300
  %v725 = vmul.f32 %v615, %v300
  %v726 = vmul.f32 %v618, %v300
  %v727 = vmul.f32 %v621, %v300
  %v728 = vmul.f32 %v624, %v300
  %v729 = vmul.f32 %v627, %v300
  %v730 = vmul.f32 %v630, %v300
  %v731 = vmul.f32 %v633, %v300
  %v732 = vmul.f32 %v636, %v300
  %v733 = vmul.f32 %v639, %v300
  %v734 = vmul.f32 %v642, %v300
  %v735 = vmul.f32 %v645, %v300
  %v736 = vmul.f32 %v648, %v300
  %v737 = vmul.f32 %v651, %v300
  %v738 = vmul.f32 %v654, %v300
  %v739 = vmul.f32 %v657, %v300
  %v740 = vmul.f32 %v660, %v300
  %v741 = vmul.f32 %v663, %v300
  %v742 = vmul.f32 %v666, %v300
  %v743 = vmul.f32 %v669, %v300
  %v744 = vmul.f32 %v672, %v300
  %v745 = vmul.f32 %v675, %v300
  %v746 = vmul.f32 %v678, %v300
  %v747 = vmul.f32 %v681, %v300
  %v748 = vmul.f32 %v684, %v300
  %v749 = vadd.f32 %v685, 1e-05
  %v750 = vadd.f32 %v686, 1e-05
  %v751 = vadd.f32 %v687, 1e-05
  %v752 = vadd.f32 %v688, 1e-05
  %v753 = vadd.f32 %v689, 1e-05
  %v754 = vadd.f32 %v690, 1e-05
  %v755 = vadd.f32 %v691, 1e-05
  %v756 = vadd.f32 %v692, 1e-05
  %v757 = vadd.f32 %v693, 1e-05
  %v758 = vadd.f32 %v694, 1e-05
  %v759 = vadd.f32 %v695, 1e-05
  %v760 = vadd.f32 %v696, 1e-05
  %v761 = vadd.f32 %v697, 1e-05
  %v762 = vadd.f32 %v698, 1e-05
  %v763 = vadd.f32 %v699, 1e-05
  %v764 = vadd.f32 %v700, 1e-05
  %v765 = vadd.f32 %v701, 1e-05
  %v766 = vadd.f32 %v702, 1e-05
  %v767 = vadd.f32 %v703, 1e-05
  %v768 = vadd.f32 %v704, 1e-05
  %v769 = vadd.f32 %v705, 1e-05
  %v770 = vadd.f32 %v706, 1e-05
  %v771 = vadd.f32 %v707, 1e-05
  %v772 = vadd.f32 %v708, 1e-05
  %v773 = vadd.f32 %v709, 1e-05
  %v774 = vadd.f32 %v710, 1e-05
  %v775 = vadd.f32 %v711, 1e-05
  %v776 = vadd.f32 %v712, 1e-05
  %v777 = vadd.f32 %v713, 1e-05
  %v778 = vadd.f32 %v714, 1e-05
  %v779 = vadd.f32 %v715, 1e-05
  %v780 = vadd.f32 %v716, 1e-05
  %v781 = vadd.f32 %v717, 1e-05
  %v782 = vadd.f32 %v718, 1e-05
  %v783 = vadd.f32 %v719, 1e-05
  %v784 = vadd.f32 %v720, 1e-05
  %v785 = vadd.f32 %v721, 1e-05
  %v786 = vadd.f32 %v722, 1e-05
  %v787 = vadd.f32 %v723, 1e-05
  %v788 = vadd.f32 %v724, 1e-05
  %v789 = vadd.f32 %v725, 1e-05
  %v790 = vadd.f32 %v726, 1e-05
  %v791 = vadd.f32 %v727, 1e-05
  %v792 = vadd.f32 %v728, 1e-05
  %v793 = vadd.f32 %v729, 1e-05
  %v794 = vadd.f32 %v730, 1e-05
  %v795 = vadd.f32 %v731, 1e-05
  %v796 = vadd.f32 %v732, 1e-05
  %v797 = vadd.f32 %v733, 1e-05
  %v798 = vadd.f32 %v734, 1e-05
  %v799 = vadd.f32 %v735, 1e-05
  %v800 = vadd.f32 %v736, 1e-05
  %v801 = vadd.f32 %v737, 1e-05
  %v802 = vadd.f32 %v738, 1e-05
  %v803 = vadd.f32 %v739, 1e-05
  %v804 = vadd.f32 %v740, 1e-05
  %v805 = vadd.f32 %v741, 1e-05
  %v806 = vadd.f32 %v742, 1e-05
  %v807 = vadd.f32 %v743, 1e-05
  %v808 = vadd.f32 %v744, 1e-05
  %v809 = vadd.f32 %v745, 1e-05
  %v810 = vadd.f32 %v746, 1e-05
  %v811 = vadd.f32 %v747, 1e-05
  %v812 = vadd.f32 %v748, 1e-05
  %v813 = vrsqrt.pop %v749
  %v814 = vmul.f32 %v813, %v749
  %v815 = vmul.f32 %v814, %v813
  %v816 = vmul.f32 0.5, %v815
  %v817 = vsub.f32 1.5, %v816
  %v818 = vmul.f32 %v813, %v817
  %vm819 = vweird.f32 %v749
  %vm820 = vweird.f32 %v813
  %vm821 = vmor %vm819, %vm820
  %v822 = vsel %vm821, %v813, %v818
  %v823 = vrsqrt.pop %v750
  %v824 = vmul.f32 %v823, %v750
  %v825 = vmul.f32 %v824, %v823
  %v826 = vmul.f32 0.5, %v825
  %v827 = vsub.f32 1.5, %v826
  %v828 = vmul.f32 %v823, %v827
  %vm829 = vweird.f32 %v750
  %vm830 = vweird.f32 %v823
  %vm831 = vmor %vm829, %vm830
  %v832 = vsel %vm831, %v823, %v828
  %v833 = vrsqrt.pop %v751
  %v834 = vmul.f32 %v833, %v751
  %v835 = vmul.f32 %v834, %v833
  %v836 = vmul.f32 0.5, %v835
  %v837 = vsub.f32 1.5, %v836
  %v838 = vmul.f32 %v833, %v837
  %vm839 = vweird.f32 %v751
  %vm840 = vweird.f32 %v833
  %vm841 = vmor %vm839, %vm840
  %v842 = vsel %vm841, %v833, %v838
  %v843 = vrsqrt.pop %v752
  %v844 = vmul.f32 %v843, %v752
  %v845 = vmul.f32 %v844, %v843
  %v846 = vmul.f32 0.5, %v845
  %v847 = vsub.f32 1.5, %v846
  %v848 = vmul.f32 %v843, %v847
  %vm849 = vweird.f32 %v752
  %vm850 = vweird.f32 %v843
  %vm851 = vmor %vm849, %vm850
  %v852 = vsel %vm851, %v843, %v848
  %v853 = vrsqrt.pop %v753
  %v854 = vmul.f32 %v853, %v753
  %v855 = vmul.f32 %v854, %v853
  %v856 = vmul.f32 0.5, %v855
  %v857 = vsub.f32 1.5, %v856
  %v858 = vmul.f32 %v853, %v857
  %vm859 = vweird.f32 %v753
  %vm860 = vweird.f32 %v853
  %vm861 = vmor %vm859, %vm860
  %v862 = vsel %vm861, %v853, %v858
  %v863 = vrsqrt.pop %v754
  %v864 = vmul.f32 %v863, %v754
  %v865 = vmul.f32 %v864, %v863
  %v866 = vmul.f32 0.5, %v865
  %v867 = vsub.f32 1.5, %v866
  %v868 = vmul.f32 %v863, %v867
  %vm869 = vweird.f32 %v754
  %vm870 = vweird.f32 %v863
  %vm871 = vmor %vm869, %vm870
  %v872 = vsel %vm871, %v863, %v868
  %v873 = vrsqrt.pop %v755
  %v874 = vmul.f32 %v873, %v755
  %v875 = vmul.f32 %v874, %v873
  %v876 = vmul.f32 0.5, %v875
  %v877 = vsub.f32 1.5, %v876
  %v878 = vmul.f32 %v873, %v877
  %vm879 = vweird.f32 %v755
  %vm880 = vweird.f32 %v873
  %vm881 = vmor %vm879, %vm880
  %v882 = vsel %vm881, %v873, %v878
  %v883 = vrsqrt.pop %v756
  %v884 = vmul.f32 %v883, %v756
  %v885 = vmul.f32 %v884, %v883
  %v886 = vmul.f32 0.5, %v885
  %v887 = vsub.f32 1.5, %v886
  %v888 = vmul.f32 %v883, %v887
  %vm889 = vweird.f32 %v756
  %vm890 = vweird.f32 %v883
  %vm891 = vmor %vm889, %vm890
  %v892 = vsel %vm891, %v883, %v888
  %v893 = vrsqrt.pop %v757
  %v894 = vmul.f32 %v893, %v757
  %v895 = vmul.f32 %v894, %v893
  %v896 = vmul.f32 0.5, %v895
  %v897 = vsub.f32 1.5, %v896
  %v898 = vmul.f32 %v893, %v897
  %vm899 = vweird.f32 %v757
  %vm900 = vweird.f32 %v893
  %vm901 = vmor %vm899, %vm900
  %v902 = vsel %vm901, %v893, %v898
  %v903 = vrsqrt.pop %v758
  %v904 = vmul.f32 %v903, %v758
  %v905 = vmul.f32 %v904, %v903
  %v906 = vmul.f32 0.5, %v905
  %v907 = vsub.f32 1.5, %v906
  %v908 = vmul.f32 %v903, %v907
  %vm909 = vweird.f32 %v758
  %vm910 = vweird.f32 %v903
  %vm911 = vmor %vm909, %vm910
  %v912 = vsel %vm911, %v903, %v908
  %v913 = vrsqrt.pop %v759
  %v914 = vmul.f32 %v913, %v759
  %v915 = vmul.f32 %v914, %v913
  %v916 = vmul.f32 0.5, %v915
  %v917 = vsub.f32 1.5, %v916
  %v918 = vmul.f32 %v913, %v917
  %vm919 = vweird.f32 %v759
  %vm920 = vweird.f32 %v913
  %vm921 = vmor %vm919, %vm920
  %v922 = vsel %vm921, %v913, %v918
  %v923 = vrsqrt.pop %v760
  %v924 = vmul.f32 %v923, %v760
  %v925 = vmul.f32 %v924, %v923
  %v926 = vmul.f32 0.5, %v925
  %v927 = vsub.f32 1.5, %v926
  %v928 = vmul.f32 %v923, %v927
  %vm929 = vweird.f32 %v760
  %vm930 = vweird.f32 %v923
  %vm931 = vmor %vm929, %vm930
  %v932 = vsel %vm931, %v923, %v928
  %v933 = vrsqrt.pop %v761
  %v934 = vmul.f32 %v933, %v761
  %v935 = vmul.f32 %v934, %v933
  %v936 = vmul.f32 0.5, %v935
  %v937 = vsub.f32 1.5, %v936
  %v938 = vmul.f32 %v933, %v937
  %vm939 = vweird.f32 %v761
  %vm940 = vweird.f32 %v933
  %vm941 = vmor %vm939, %vm940
  %v942 = vsel %vm941, %v933, %v938
  %v943 = vrsqrt.pop %v762
  %v944 = vmul.f32 %v943, %v762
  %v945 = vmul.f32 %v944, %v943
  %v946 = vmul.f32 0.5, %v945
  %v947 = vsub.f32 1.5, %v946
  %v948 = vmul.f32 %v943, %v947
  %vm949 = vweird.f32 %v762
  %vm950 = vweird.f32 %v943
  %vm951 = vmor %vm949, %vm950
  %v952 = vsel %vm951, %v943, %v948
  %v953 = vrsqrt.pop %v763
  %v954 = vmul.f32 %v953, %v763
  %v955 = vmul.f32 %v954, %v953
  %v956 = vmul.f32 0.5, %v955
  %v957 = vsub.f32 1.5, %v956
  %v958 = vmul.f32 %v953, %v957
  %vm959 = vweird.f32 %v763
  %vm960 = vweird.f32 %v953
  %vm961 = vmor %vm959, %vm960
  %v962 = vsel %vm961, %v953, %v958
  %v963 = vrsqrt.pop %v764
  %v964 = vmul.f32 %v963, %v764
  %v965 = vmul.f32 %v964, %v963
  %v966 = vmul.f32 0.5, %v965
  %v967 = vsub.f32 1.5, %v966
  %v968 = vmul.f32 %v963, %v967
  %vm969 = vweird.f32 %v764
  %vm970 = vweird.f32 %v963
  %vm971 = vmor %vm969, %vm970
  %v972 = vsel %vm971, %v963, %v968
  %v973 = vrsqrt.pop %v765
  %v974 = vmul.f32 %v973, %v765
  %v975 = vmul.f32 %v974, %v973
  %v976 = vmul.f32 0.5, %v975
  %v977 = vsub.f32 1.5, %v976
  %v978 = vmul.f32 %v973, %v977
  %vm979 = vweird.f32 %v765
  %vm980 = vweird.f32 %v973
  %vm981 = vmor %vm979, %vm980
  %v982 = vsel %vm981, %v973, %v978
  %v983 = vrsqrt.pop %v766
  %v984 = vmul.f32 %v983, %v766
  %v985 = vmul.f32 %v984, %v983
  %v986 = vmul.f32 0.5, %v985
  %v987 = vsub.f32 1.5, %v986
  %v988 = vmul.f32 %v983, %v987
  %vm989 = vweird.f32 %v766
  %vm990 = vweird.f32 %v983
  %vm991 = vmor %vm989, %vm990
  %v992 = vsel %vm991, %v983, %v988
  %v993 = vrsqrt.pop %v767
  %v994 = vmul.f32 %v993, %v767
  %v995 = vmul.f32 %v994, %v993
  %v996 = vmul.f32 0.5, %v995
  %v997 = vsub.f32 1.5, %v996
  %v998 = vmul.f32 %v993, %v997
  %vm999 = vweird.f32 %v767
  %vm1000 = vweird.f32 %v993
  %vm1001 = vmor %vm999, %vm1000
  %v1002 = vsel %vm1001, %v993, %v998
  %v1003 = vrsqrt.pop %v768
  %v1004 = vmul.f32 %v1003, %v768
  %v1005 = vmul.f32 %v1004, %v1003
  %v1006 = vmul.f32 0.5, %v1005
  %v1007 = vsub.f32 1.5, %v1006
  %v1008 = vmul.f32 %v1003, %v1007
  %vm1009 = vweird.f32 %v768
  %vm1010 = vweird.f32 %v1003
  %vm1011 = vmor %vm1009, %vm1010
  %v1012 = vsel %vm1011, %v1003, %v1008
  %v1013 = vrsqrt.pop %v769
  %v1014 = vmul.f32 %v1013, %v769
  %v1015 = vmul.f32 %v1014, %v1013
  %v1016 = vmul.f32 0.5, %v1015
  %v1017 = vsub.f32 1.5, %v1016
  %v1018 = vmul.f32 %v1013, %v1017
  %vm1019 = vweird.f32 %v769
  %vm1020 = vweird.f32 %v1013
  %vm1021 = vmor %vm1019, %vm1020
  %v1022 = vsel %vm1021, %v1013, %v1018
  %v1023 = vrsqrt.pop %v770
  %v1024 = vmul.f32 %v1023, %v770
  %v1025 = vmul.f32 %v1024, %v1023
  %v1026 = vmul.f32 0.5, %v1025
  %v1027 = vsub.f32 1.5, %v1026
  %v1028 = vmul.f32 %v1023, %v1027
  %vm1029 = vweird.f32 %v770
  %vm1030 = vweird.f32 %v1023
  %vm1031 = vmor %vm1029, %vm1030
  %v1032 = vsel %vm1031, %v1023, %v1028
  %v1033 = vrsqrt.pop %v771
  %v1034 = vmul.f32 %v1033, %v771
  %v1035 = vmul.f32 %v1034, %v1033
  %v1036 = vmul.f32 0.5, %v1035
  %v1037 = vsub.f32 1.5, %v1036
  %v1038 = vmul.f32 %v1033, %v1037
  %vm1039 = vweird.f32 %v771
  %vm1040 = vweird.f32 %v1033
  %vm1041 = vmor %vm1039, %vm1040
  %v1042 = vsel %vm1041, %v1033, %v1038
  %v1043 = vrsqrt.pop %v772
  %v1044 = vmul.f32 %v1043, %v772
  %v1045 = vmul.f32 %v1044, %v1043
  %v1046 = vmul.f32 0.5, %v1045
  %v1047 = vsub.f32 1.5, %v1046
  %v1048 = vmul.f32 %v1043, %v1047
  %vm1049 = vweird.f32 %v772
  %vm1050 = vweird.f32 %v1043
  %vm1051 = vmor %vm1049, %vm1050
  %v1052 = vsel %vm1051, %v1043, %v1048
  %v1053 = vrsqrt.pop %v773
  %v1054 = vmul.f32 %v1053, %v773
  %v1055 = vmul.f32 %v1054, %v1053
  %v1056 = vmul.f32 0.5, %v1055
  %v1057 = vsub.f32 1.5, %v1056
  %v1058 = vmul.f32 %v1053, %v1057
  %vm1059 = vweird.f32 %v773
  %vm1060 = vweird.f32 %v1053
  %vm1061 = vmor %vm1059, %vm1060
  %v1062 = vsel %vm1061, %v1053, %v1058
  %v1063 = vrsqrt.pop %v774
  %v1064 = vmul.f32 %v1063, %v774
  %v1065 = vmul.f32 %v1064, %v1063
  %v1066 = vmul.f32 0.5, %v1065
  %v1067 = vsub.f32 1.5, %v1066
  %v1068 = vmul.f32 %v1063, %v1067
  %vm1069 = vweird.f32 %v774
  %vm1070 = vweird.f32 %v1063
  %vm1071 = vmor %vm1069, %vm1070
  %v1072 = vsel %vm1071, %v1063, %v1068
  %v1073 = vrsqrt.pop %v775
  %v1074 = vmul.f32 %v1073, %v775
  %v1075 = vmul.f32 %v1074, %v1073
  %v1076 = vmul.f32 0.5, %v1075
  %v1077 = vsub.f32 1.5, %v1076
  %v1078 = vmul.f32 %v1073, %v1077
  %vm1079 = vweird.f32 %v775
  %vm1080 = vweird.f32 %v1073
  %vm1081 = vmor %vm1079, %vm1080
  %v1082 = vsel %vm1081, %v1073, %v1078
  %v1083 = vrsqrt.pop %v776
  %v1084 = vmul.f32 %v1083, %v776
  %v1085 = vmul.f32 %v1084, %v1083
  %v1086 = vmul.f32 0.5, %v1085
  %v1087 = vsub.f32 1.5, %v1086
  %v1088 = vmul.f32 %v1083, %v1087
  %vm1089 = vweird.f32 %v776
  %vm1090 = vweird.f32 %v1083
  %vm1091 = vmor %vm1089, %vm1090
  %v1092 = vsel %vm1091, %v1083, %v1088
  %v1093 = vrsqrt.pop %v777
  %v1094 = vmul.f32 %v1093, %v777
  %v1095 = vmul.f32 %v1094, %v1093
  %v1096 = vmul.f32 0.5, %v1095
  %v1097 = vsub.f32 1.5, %v1096
  %v1098 = vmul.f32 %v1093, %v1097
  %vm1099 = vweird.f32 %v777
  %vm1100 = vweird.f32 %v1093
  %vm1101 = vmor %vm1099, %vm1100
  %v1102 = vsel %vm1101, %v1093, %v1098
  %v1103 = vrsqrt.pop %v778
  %v1104 = vmul.f32 %v1103, %v778
  %v1105 = vmul.f32 %v1104, %v1103
  %v1106 = vmul.f32 0.5, %v1105
  %v1107 = vsub.f32 1.5, %v1106
  %v1108 = vmul.f32 %v1103, %v1107
  %vm1109 = vweird.f32 %v778
  %vm1110 = vweird.f32 %v1103
  %vm1111 = vmor %vm1109, %vm1110
  %v1112 = vsel %vm1111, %v1103, %v1108
  %v1113 = vrsqrt.pop %v779
  %v1114 = vmul.f32 %v1113, %v779
  %v1115 = vmul.f32 %v1114, %v1113
  %v1116 = vmul.f32 0.5, %v1115
  %v1117 = vsub.f32 1.5, %v1116
  %v1118 = vmul.f32 %v1113, %v1117
  %vm1119 = vweird.f32 %v779
  %vm1120 = vweird.f32 %v1113
  %vm1121 = vmor %vm1119, %vm1120
  %v1122 = vsel %vm1121, %v1113, %v1118
  %v1123 = vrsqrt.pop %v780
  %v1124 = vmul.f32 %v1123, %v780
  %v1125 = vmul.f32 %v1124, %v1123
  %v1126 = vmul.f32 0.5, %v1125
  %v1127 = vsub.f32 1.5, %v1126
  %v1128 = vmul.f32 %v1123, %v1127
  %vm1129 = vweird.f32 %v780
  %vm1130 = vweird.f32 %v1123
  %vm1131 = vmor %vm1129, %vm1130
  %v1132 = vsel %vm1131, %v1123, %v1128
  %v1133 = vrsqrt.pop %v781
  %v1134 = vmul.f32 %v1133, %v781
  %v1135 = vmul.f32 %v1134, %v1133
  %v1136 = vmul.f32 0.5, %v1135
  %v1137 = vsub.f32 1.5, %v1136
  %v1138 = vmul.f32 %v1133, %v1137
  %vm1139 = vweird.f32 %v781
  %vm1140 = vweird.f32 %v1133
  %vm1141 = vmor %vm1139, %vm1140
  %v1142 = vsel %vm1141, %v1133, %v1138
  %v1143 = vrsqrt.pop %v782
  %v1144 = vmul.f32 %v1143, %v782
  %v1145 = vmul.f32 %v1144, %v1143
  %v1146 = vmul.f32 0.5, %v1145
  %v1147 = vsub.f32 1.5, %v1146
  %v1148 = vmul.f32 %v1143, %v1147
  %vm1149 = vweird.f32 %v782
  %vm1150 = vweird.f32 %v1143
  %vm1151 = vmor %vm1149, %vm1150
  %v1152 = vsel %vm1151, %v1143, %v1148
  %v1153 = vrsqrt.pop %v783
  %v1154 = vmul.f32 %v1153, %v783
  %v1155 = vmul.f32 %v1154, %v1153
  %v1156 = vmul.f32 0.5, %v1155
  %v1157 = vsub.f32 1.5, %v1156
  %v1158 = vmul.f32 %v1153, %v1157
  %vm1159 = vweird.f32 %v783
  %vm1160 = vweird.f32 %v1153
  %vm1161 = vmor %vm1159, %vm1160
  %v1162 = vsel %vm1161, %v1153, %v1158
  %v1163 = vrsqrt.pop %v784
  %v1164 = vmul.f32 %v1163, %v784
  %v1165 = vmul.f32 %v1164, %v1163
  %v1166 = vmul.f32 0.5, %v1165
  %v1167 = vsub.f32 1.5, %v1166
  %v1168 = vmul.f32 %v1163, %v1167
  %vm1169 = vweird.f32 %v784
  %vm1170 = vweird.f32 %v1163
  %vm1171 = vmor %vm1169, %vm1170
  %v1172 = vsel %vm1171, %v1163, %v1168
  %v1173 = vrsqrt.pop %v785
  %v1174 = vmul.f32 %v1173, %v785
  %v1175 = vmul.f32 %v1174, %v1173
  %v1176 = vmul.f32 0.5, %v1175
  %v1177 = vsub.f32 1.5, %v1176
  %v1178 = vmul.f32 %v1173, %v1177
  %vm1179 = vweird.f32 %v785
  %vm1180 = vweird.f32 %v1173
  %vm1181 = vmor %vm1179, %vm1180
  %v1182 = vsel %vm1181, %v1173, %v1178
  %v1183 = vrsqrt.pop %v786
  %v1184 = vmul.f32 %v1183, %v786
  %v1185 = vmul.f32 %v1184, %v1183
  %v1186 = vmul.f32 0.5, %v1185
  %v1187 = vsub.f32 1.5, %v1186
  %v1188 = vmul.f32 %v1183, %v1187
  %vm1189 = vweird.f32 %v786
  %vm1190 = vweird.f32 %v1183
  %vm1191 = vmor %vm1189, %vm1190
  %v1192 = vsel %vm1191, %v1183, %v1188
  %v1193 = vrsqrt.pop %v787
  %v1194 = vmul.f32 %v1193, %v787
  %v1195 = vmul.f32 %v1194, %v1193
  %v1196 = vmul.f32 0.5, %v1195
  %v1197 = vsub.f32 1.5, %v1196
  %v1198 = vmul.f32 %v1193, %v1197
  %vm1199 = vweird.f32 %v787
  %vm1200 = vweird.f32 %v1193
  %vm1201 = vmor %vm1199, %vm1200
  %v1202 = vsel %vm1201, %v1193, %v1198
  %v1203 = vrsqrt.pop %v788
  %v1204 = vmul.f32 %v1203, %v788
  %v1205 = vmul.f32 %v1204, %v1203
  %v1206 = vmul.f32 0.5, %v1205
  %v1207 = vsub.f32 1.5, %v1206
  %v1208 = vmul.f32 %v1203, %v1207
  %vm1209 = vweird.f32 %v788
  %vm1210 = vweird.f32 %v1203
  %vm1211 = vmor %vm1209, %vm1210
  %v1212 = vsel %vm1211, %v1203, %v1208
  %v1213 = vrsqrt.pop %v789
  %v1214 = vmul.f32 %v1213, %v789
  %v1215 = vmul.f32 %v1214, %v1213
  %v1216 = vmul.f32 0.5, %v1215
  %v1217 = vsub.f32 1.5, %v1216
  %v1218 = vmul.f32 %v1213, %v1217
  %vm1219 = vweird.f32 %v789
  %vm1220 = vweird.f32 %v1213
  %vm1221 = vmor %vm1219, %vm1220
  %v1222 = vsel %vm1221, %v1213, %v1218
  %v1223 = vrsqrt.pop %v790
  %v1224 = vmul.f32 %v1223, %v790
  %v1225 = vmul.f32 %v1224, %v1223
  %v1226 = vmul.f32 0.5, %v1225
  %v1227 = vsub.f32 1.5, %v1226
  %v1228 = vmul.f32 %v1223, %v1227
  %vm1229 = vweird.f32 %v790
  %vm1230 = vweird.f32 %v1223
  %vm1231 = vmor %vm1229, %vm1230
  %v1232 = vsel %vm1231, %v1223, %v1228
  %v1233 = vrsqrt.pop %v791
  %v1234 = vmul.f32 %v1233, %v791
  %v1235 = vmul.f32 %v1234, %v1233
  %v1236 = vmul.f32 0.5, %v1235
  %v1237 = vsub.f32 1.5, %v1236
  %v1238 = vmul.f32 %v1233, %v1237
  %vm1239 = vweird.f32 %v791
  %vm1240 = vweird.f32 %v1233
  %vm1241 = vmor %vm1239, %vm1240
  %v1242 = vsel %vm1241, %v1233, %v1238
  %v1243 = vrsqrt.pop %v792
  %v1244 = vmul.f32 %v1243, %v792
  %v1245 = vmul.f32 %v1244, %v1243
  %v1246 = vmul.f32 0.5, %v1245
  %v1247 = vsub.f32 1.5, %v1246
  %v1248 = vmul.f32 %v1243, %v1247
  %vm1249 = vweird.f32 %v792
  %vm1250 = vweird.f32 %v1243
  %vm1251 = vmor %vm1249, %vm1250
  %v1252 = vsel %vm1251, %v1243, %v1248
  %v1253 = vrsqrt.pop %v793
  %v1254 = vmul.f32 %v1253, %v793
  %v1255 = vmul.f32 %v1254, %v1253
  %v1256 = vmul.f32 0.5, %v1255
  %v1257 = vsub.f32 1.5, %v1256
  %v1258 = vmul.f32 %v1253, %v1257
  %vm1259 = vweird.f32 %v793
  %vm1260 = vweird.f32 %v1253
  %vm1261 = vmor %vm1259, %vm1260
  %v1262 = vsel %vm1261, %v1253, %v1258
  %v1263 = vrsqrt.pop %v794
  %v1264 = vmul.f32 %v1263, %v794
  %v1265 = vmul.f32 %v1264, %v1263
  %v1266 = vmul.f32 0.5, %v1265
  %v1267 = vsub.f32 1.5, %v1266
  %v1268 = vmul.f32 %v1263, %v1267
  %vm1269 = vweird.f32 %v794
  %vm1270 = vweird.f32 %v1263
  %vm1271 = vmor %vm1269, %vm1270
  %v1272 = vsel %vm1271, %v1263, %v1268
  %v1273 = vrsqrt.pop %v795
  %v1274 = vmul.f32 %v1273, %v795
  %v1275 = vmul.f32 %v1274, %v1273
  %v1276 = vmul.f32 0.5, %v1275
  %v1277 = vsub.f32 1.5, %v1276
  %v1278 = vmul.f32 %v1273, %v1277
  %vm1279 = vweird.f32 %v795
  %vm1280 = vweird.f32 %v1273
  %vm1281 = vmor %vm1279, %vm1280
  %v1282 = vsel %vm1281, %v1273, %v1278
  %v1283 = vrsqrt.pop %v796
  %v1284 = vmul.f32 %v1283, %v796
  %v1285 = vmul.f32 %v1284, %v1283
  %v1286 = vmul.f32 0.5, %v1285
  %v1287 = vsub.f32 1.5, %v1286
  %v1288 = vmul.f32 %v1283, %v1287
  %vm1289 = vweird.f32 %v796
  %vm1290 = vweird.f32 %v1283
  %vm1291 = vmor %vm1289, %vm1290
  %v1292 = vsel %vm1291, %v1283, %v1288
  %v1293 = vrsqrt.pop %v797
  %v1294 = vmul.f32 %v1293, %v797
  %v1295 = vmul.f32 %v1294, %v1293
  %v1296 = vmul.f32 0.5, %v1295
  %v1297 = vsub.f32 1.5, %v1296
  %v1298 = vmul.f32 %v1293, %v1297
  %vm1299 = vweird.f32 %v797
  %vm1300 = vweird.f32 %v1293
  %vm1301 = vmor %vm1299, %vm1300
  %v1302 = vsel %vm1301, %v1293, %v1298
  %v1303 = vrsqrt.pop %v798
  %v1304 = vmul.f32 %v1303, %v798
  %v1305 = vmul.f32 %v1304, %v1303
  %v1306 = vmul.f32 0.5, %v1305
  %v1307 = vsub.f32 1.5, %v1306
  %v1308 = vmul.f32 %v1303, %v1307
  %vm1309 = vweird.f32 %v798
  %vm1310 = vweird.f32 %v1303
  %vm1311 = vmor %vm1309, %vm1310
  %v1312 = vsel %vm1311, %v1303, %v1308
  %v1313 = vrsqrt.pop %v799
  %v1314 = vmul.f32 %v1313, %v799
  %v1315 = vmul.f32 %v1314, %v1313
  %v1316 = vmul.f32 0.5, %v1315
  %v1317 = vsub.f32 1.5, %v1316
  %v1318 = vmul.f32 %v1313, %v1317
  %vm1319 = vweird.f32 %v799
  %vm1320 = vweird.f32 %v1313
  %vm1321 = vmor %vm1319, %vm1320
  %v1322 = vsel %vm1321, %v1313, %v1318
  %v1323 = vrsqrt.pop %v800
  %v1324 = vmul.f32 %v1323, %v800
  %v1325 = vmul.f32 %v1324, %v1323
  %v1326 = vmul.f32 0.5, %v1325
  %v1327 = vsub.f32 1.5, %v1326
  %v1328 = vmul.f32 %v1323, %v1327
  %vm1329 = vweird.f32 %v800
  %vm1330 = vweird.f32 %v1323
  %vm1331 = vmor %vm1329, %vm1330
  %v1332 = vsel %vm1331, %v1323, %v1328
  %v1333 = vrsqrt.pop %v801
  %v1334 = vmul.f32 %v1333, %v801
  %v1335 = vmul.f32 %v1334, %v1333
  %v1336 = vmul.f32 0.5, %v1335
  %v1337 = vsub.f32 1.5, %v1336
  %v1338 = vmul.f32 %v1333, %v1337
  %vm1339 = vweird.f32 %v801
  %vm1340 = vweird.f32 %v1333
  %vm1341 = vmor %vm1339, %vm1340
  %v1342 = vsel %vm1341, %v1333, %v1338
  %v1343 = vrsqrt.pop %v802
  %v1344 = vmul.f32 %v1343, %v802
  %v1345 = vmul.f32 %v1344, %v1343
  %v1346 = vmul.f32 0.5, %v1345
  %v1347 = vsub.f32 1.5, %v1346
  %v1348 = vmul.f32 %v1343, %v1347
  %vm1349 = vweird.f32 %v802
  %vm1350 = vweird.f32 %v1343
  %vm1351 = vmor %vm1349, %vm1350
  %v1352 = vsel %vm1351, %v1343, %v1348
  %v1353 = vrsqrt.pop %v803
  %v1354 = vmul.f32 %v1353, %v803
  %v1355 = vmul.f32 %v1354, %v1353
  %v1356 = vmul.f32 0.5, %v1355
  %v1357 = vsub.f32 1.5, %v1356
  %v1358 = vmul.f32 %v1353, %v1357
  %vm1359 = vweird.f32 %v803
  %vm1360 = vweird.f32 %v1353
  %vm1361 = vmor %vm1359, %vm1360
  %v1362 = vsel %vm1361, %v1353, %v1358
  %v1363 = vrsqrt.pop %v804
  %v1364 = vmul.f32 %v1363, %v804
  %v1365 = vmul.f32 %v1364, %v1363
  %v1366 = vmul.f32 0.5, %v1365
  %v1367 = vsub.f32 1.5, %v1366
  %v1368 = vmul.f32 %v1363, %v1367
  %vm1369 = vweird.f32 %v804
  %vm1370 = vweird.f32 %v1363
  %vm1371 = vmor %vm1369, %vm1370
  %v1372 = vsel %vm1371, %v1363, %v1368
  %v1373 = vrsqrt.pop %v805
  %v1374 = vmul.f32 %v1373, %v805
  %v1375 = vmul.f32 %v1374, %v1373
  %v1376 = vmul.f32 0.5, %v1375
  %v1377 = vsub.f32 1.5, %v1376
  %v1378 = vmul.f32 %v1373, %v1377
  %vm1379 = vweird.f32 %v805
  %vm1380 = vweird.f32 %v1373
  %vm1381 = vmor %vm1379, %vm1380
  %v1382 = vsel %vm1381, %v1373, %v1378
  %v1383 = vrsqrt.pop %v806
  %v1384 = vmul.f32 %v1383, %v806
  %v1385 = vmul.f32 %v1384, %v1383
  %v1386 = vmul.f32 0.5, %v1385
  %v1387 = vsub.f32 1.5, %v1386
  %v1388 = vmul.f32 %v1383, %v1387
  %vm1389 = vweird.f32 %v806
  %vm1390 = vweird.f32 %v1383
  %vm1391 = vmor %vm1389, %vm1390
  %v1392 = vsel %vm1391, %v1383, %v1388
  %v1393 = vrsqrt.pop %v807
  %v1394 = vmul.f32 %v1393, %v807
  %v1395 = vmul.f32 %v1394, %v1393
  %v1396 = vmul.f32 0.5, %v1395
  %v1397 = vsub.f32 1.5, %v1396
  %v1398 = vmul.f32 %v1393, %v1397
  %vm1399 = vweird.f32 %v807
  %vm1400 = vweird.f32 %v1393
  %vm1401 = vmor %vm1399, %vm1400
  %v1402 = vsel %vm1401, %v1393, %v1398
  %v1403 = vrsqrt.pop %v808
  %v1404 = vmul.f32 %v1403, %v808
  %v1405 = vmul.f32 %v1404, %v1403
  %v1406 = vmul.f32 0.5, %v1405
  %v1407 = vsub.f32 1.5, %v1406
  %v1408 = vmul.f32 %v1403, %v1407
  %vm1409 = vweird.f32 %v808
  %vm1410 = vweird.f32 %v1403
  %vm1411 = vmor %vm1409, %vm1410
  %v1412 = vsel %vm1411, %v1403, %v1408
  %v1413 = vrsqrt.pop %v809
  %v1414 = vmul.f32 %v1413, %v809
  %v1415 = vmul.f32 %v1414, %v1413
  %v1416 = vmul.f32 0.5, %v1415
  %v1417 = vsub.f32 1.5, %v1416
  %v1418 = vmul.f32 %v1413, %v1417
  %vm1419 = vweird.f32 %v809
  %vm1420 = vweird.f32 %v1413
  %vm1421 = vmor %vm1419, %vm1420
  %v1422 = vsel %vm1421, %v1413, %v1418
  %v1423 = vrsqrt.pop %v810
  %v1424 = vmul.f32 %v1423, %v810
  %v1425 = vmul.f32 %v1424, %v1423
  %v1426 = vmul.f32 0.5, %v1425
  %v1427 = vsub.f32 1.5, %v1426
  %v1428 = vmul.f32 %v1423, %v1427
  %vm1429 = vweird.f32 %v810
  %vm1430 = vweird.f32 %v1423
  %vm1431 = vmor %vm1429, %vm1430
  %v1432 = vsel %vm1431, %v1423, %v1428
  %v1433 = vrsqrt.pop %v811
  %v1434 = vmul.f32 %v1433, %v811
  %v1435 = vmul.f32 %v1434, %v1433
  %v1436 = vmul.f32 0.5, %v1435
  %v1437 = vsub.f32 1.5, %v1436
  %v1438 = vmul.f32 %v1433, %v1437
  %vm1439 = vweird.f32 %v811
  %vm1440 = vweird.f32 %v1433
  %vm1441 = vmor %vm1439, %vm1440
  %v1442 = vsel %vm1441, %v1433, %v1438
  %v1443 = vrsqrt.pop %v812
  %v1444 = vmul.f32 %v1443, %v812
  %v1445 = vmul.f32 %v1444, %v1443
  %v1446 = vmul.f32 0.5, %v1445
  %v1447 = vsub.f32 1.5, %v1446
  %v1448 = vmul.f32 %v1443, %v1447
  %vm1449 = vweird.f32 %v812
  %vm1450 = vweird.f32 %v1443
  %vm1451 = vmor %vm1449, %vm1450
  %v1452 = vsel %vm1451, %v1443, %v1448
  %v1453 = vmul.f32 %v365, %v822
  %v1454 = vmul.f32 %v366, %v832
  %v1455 = vmul.f32 %v367, %v842
  %v1456 = vmul.f32 %v368, %v852
  %v1457 = vmul.f32 %v369, %v862
  %v1458 = vmul.f32 %v370, %v872
  %v1459 = vmul.f32 %v371, %v882
  %v1460 = vmul.f32 %v372, %v892
  %v1461 = vmul.f32 %v373, %v902
  %v1462 = vmul.f32 %v374, %v912
  %v1463 = vmul.f32 %v375, %v922
  %v1464 = vmul.f32 %v376, %v932
  %v1465 = vmul.f32 %v377, %v942
  %v1466 = vmul.f32 %v378, %v952
  %v1467 = vmul.f32 %v379, %v962
  %v1468 = vmul.f32 %v380, %v972
  %v1469 = vmul.f32 %v381, %v982
  %v1470 = vmul.f32 %v382, %v992
  %v1471 = vmul.f32 %v383, %v1002
  %v1472 = vmul.f32 %v384, %v1012
  %v1473 = vmul.f32 %v385, %v1022
  %v1474 = vmul.f32 %v386, %v1032
  %v1475 = vmul.f32 %v387, %v1042
  %v1476 = vmul.f32 %v388, %v1052
  %v1477 = vmul.f32 %v389, %v1062
  %v1478 = vmul.f32 %v390, %v1072
  %v1479 = vmul.f32 %v391, %v1082
  %v1480 = vmul.f32 %v392, %v1092
  %v1481 = vmul.f32 %v393, %v1102
  %v1482 = vmul.f32 %v394, %v1112
  %v1483 = vmul.f32 %v395, %v1122
  %v1484 = vmul.f32 %v396, %v1132
  %v1485 = vmul.f32 %v397, %v1142
  %v1486 = vmul.f32 %v398, %v1152
  %v1487 = vmul.f32 %v399, %v1162
  %v1488 = vmul.f32 %v400, %v1172
  %v1489 = vmul.f32 %v401, %v1182
  %v1490 = vmul.f32 %v402, %v1192
  %v1491 = vmul.f32 %v403, %v1202
  %v1492 = vmul.f32 %v404, %v1212
  %v1493 = vmul.f32 %v405, %v1222
  %v1494 = vmul.f32 %v406, %v1232
  %v1495 = vmul.f32 %v407, %v1242
  %v1496 = vmul.f32 %v408, %v1252
  %v1497 = vmul.f32 %v409, %v1262
  %v1498 = vmul.f32 %v410, %v1272
  %v1499 = vmul.f32 %v411, %v1282
  %v1500 = vmul.f32 %v412, %v1292
  %v1501 = vmul.f32 %v413, %v1302
  %v1502 = vmul.f32 %v414, %v1312
  %v1503 = vmul.f32 %v415, %v1322
  %v1504 = vmul.f32 %v416, %v1332
  %v1505 = vmul.f32 %v417, %v1342
  %v1506 = vmul.f32 %v418, %v1352
  %v1507 = vmul.f32 %v419, %v1362
  %v1508 = vmul.f32 %v420, %v1372
  %v1509 = vmul.f32 %v421, %v1382
  %v1510 = vmul.f32 %v422, %v1392
  %v1511 = vmul.f32 %v423, %v1402
  %v1512 = vmul.f32 %v424, %v1412
  %v1513 = vmul.f32 %v425, %v1422
  %v1514 = vmul.f32 %v426, %v1432
  %v1515 = vmul.f32 %v427, %v1442
  %v1516 = vmul.f32 %v428, %v1452
  %v1518 = vperm.slane %v99, 0
  %v1520 = vmul.f32 %v1453, %v1518
  %v1521 = vmul.f32 %v1454, %v1518
  %v1522 = vmul.f32 %v1455, %v1518
  %v1523 = vmul.f32 %v1456, %v1518
  %v1524 = vmul.f32 %v1457, %v1518
  %v1525 = vmul.f32 %v1458, %v1518
  %v1526 = vmul.f32 %v1459, %v1518
  %v1527 = vmul.f32 %v1460, %v1518
  %v1528 = vmul.f32 %v1461, %v1518
  %v1529 = vmul.f32 %v1462, %v1518
  %v1530 = vmul.f32 %v1463, %v1518
  %v1531 = vmul.f32 %v1464, %v1518
  %v1532 = vmul.f32 %v1465, %v1518
  %v1533 = vmul.f32 %v1466, %v1518
  %v1534 = vmul.f32 %v1467, %v1518
  %v1535 = vmul.f32 %v1468, %v1518
  %v1536 = vmul.f32 %v1469, %v1518
  %v1537 = vmul.f32 %v1470, %v1518
  %v1538 = vmul.f32 %v1471, %v1518
  %v1539 = vmul.f32 %v1472, %v1518
  %v1540 = vmul.f32 %v1473, %v1518
  %v1541 = vmul.f32 %v1474, %v1518
  %v1542 = vmul.f32 %v1475, %v1518
  %v1543 = vmul.f32 %v1476, %v1518
  %v1544 = vmul.f32 %v1477, %v1518
  %v1545 = vmul.f32 %v1478, %v1518
  %v1546 = vmul.f32 %v1479, %v1518
  %v1547 = vmul.f32 %v1480, %v1518
  %v1548 = vmul.f32 %v1481, %v1518
  %v1549 = vmul.f32 %v1482, %v1518
  %v1550 = vmul.f32 %v1483, %v1518
  %v1551 = vmul.f32 %v1484, %v1518
  %v1552 = vmul.f32 %v1485, %v1518
  %v1553 = vmul.f32 %v1486, %v1518
  %v1554 = vmul.f32 %v1487, %v1518
  %v1555 = vmul.f32 %v1488, %v1518
  %v1556 = vmul.f32 %v1489, %v1518
  %v1557 = vmul.f32 %v1490, %v1518
  %v1558 = vmul.f32 %v1491, %v1518
  %v1559 = vmul.f32 %v1492, %v1518
  %v1560 = vmul.f32 %v1493, %v1518
  %v1561 = vmul.f32 %v1494, %v1518
  %v1562 = vmul.f32 %v1495, %v1518
  %v1563 = vmul.f32 %v1496, %v1518
  %v1564 = vmul.f32 %v1497, %v1518
  %v1565 = vmul.f32 %v1498, %v1518
  %v1566 = vmul.f32 %v1499, %v1518
  %v1567 = vmul.f32 %v1500, %v1518
  %v1568 = vmul.f32 %v1501, %v1518
  %v1569 = vmul.f32 %v1502, %v1518
  %v1570 = vmul.f32 %v1503, %v1518
  %v1571 = vmul.f32 %v1504, %v1518
  %v1572 = vmul.f32 %v1505, %v1518
  %v1573 = vmul.f32 %v1506, %v1518
  %v1574 = vmul.f32 %v1507, %v1518
  %v1575 = vmul.f32 %v1508, %v1518
  %v1576 = vmul.f32 %v1509, %v1518
  %v1577 = vmul.f32 %v1510, %v1518
  %v1578 = vmul.f32 %v1511, %v1518
  %v1579 = vmul.f32 %v1512, %v1518
  %v1580 = vmul.f32 %v1513, %v1518
  %v1581 = vmul.f32 %v1514, %v1518
  %v1582 = vmul.f32 %v1515, %v1518
  %v1583 = vmul.f32 %v1516, %v1518
  %v1585 = vperm.slane %v100, 0
  %v1587 = vadd.f32 %v1520, %v1585
  %v1588 = vadd.f32 %v1521, %v1585
  %v1589 = vadd.f32 %v1522, %v1585
  %v1590 = vadd.f32 %v1523, %v1585
  %v1591 = vadd.f32 %v1524, %v1585
  %v1592 = vadd.f32 %v1525, %v1585
  %v1593 = vadd.f32 %v1526, %v1585
  %v1594 = vadd.f32 %v1527, %v1585
  %v1595 = vadd.f32 %v1528, %v1585
  %v1596 = vadd.f32 %v1529, %v1585
  %v1597 = vadd.f32 %v1530, %v1585
  %v1598 = vadd.f32 %v1531, %v1585
  %v1599 = vadd.f32 %v1532, %v1585
  %v1600 = vadd.f32 %v1533, %v1585
  %v1601 = vadd.f32 %v1534, %v1585
  %v1602 = vadd.f32 %v1535, %v1585
  %v1603 = vadd.f32 %v1536, %v1585
  %v1604 = vadd.f32 %v1537, %v1585
  %v1605 = vadd.f32 %v1538, %v1585
  %v1606 = vadd.f32 %v1539, %v1585
  %v1607 = vadd.f32 %v1540, %v1585
  %v1608 = vadd.f32 %v1541, %v1585
  %v1609 = vadd.f32 %v1542, %v1585
  %v1610 = vadd.f32 %v1543, %v1585
  %v1611 = vadd.f32 %v1544, %v1585
  %v1612 = vadd.f32 %v1545, %v1585
  %v1613 = vadd.f32 %v1546, %v1585
  %v1614 = vadd.f32 %v1547, %v1585
  %v1615 = vadd.f32 %v1548, %v1585
  %v1616 = vadd.f32 %v1549, %v1585
  %v1617 = vadd.f32 %v1550, %v1585
  %v1618 = vadd.f32 %v1551, %v1585
  %v1619 = vadd.f32 %v1552, %v1585
  %v1620 = vadd.f32 %v1553, %v1585
  %v1621 = vadd.f32 %v1554, %v1585
  %v1622 = vadd.f32 %v1555, %v1585
  %v1623 = vadd.f32 %v1556, %v1585
  %v1624 = vadd.f32 %v1557, %v1585
  %v1625 = vadd.f32 %v1558, %v1585
  %v1626 = vadd.f32 %v1559, %v1585
  %v1627 = vadd.f32 %v1560, %v1585
  %v1628 = vadd.f32 %v1561, %v1585
  %v1629 = vadd.f32 %v1562, %v1585
  %v1630 = vadd.f32 %v1563, %v1585
  %v1631 = vadd.f32 %v1564, %v1585
  %v1632 = vadd.f32 %v1565, %v1585
  %v1633 = vadd.f32 %v1566, %v1585
  %v1634 = vadd.f32 %v1567, %v1585
  %v1635 = vadd.f32 %v1568, %v1585
  %v1636 = vadd.f32 %v1569, %v1585
  %v1637 = vadd.f32 %v1570, %v1585
  %v1638 = vadd.f32 %v1571, %v1585
  %v1639 = vadd.f32 %v1572, %v1585
  %v1640 = vadd.f32 %v1573, %v1585
  %v1641 = vadd.f32 %v1574, %v1585
  %v1642 = vadd.f32 %v1575, %v1585
  %v1643 = vadd.f32 %v1576, %v1585
  %v1644 = vadd.f32 %v1577, %v1585
  %v1645 = vadd.f32 %v1578, %v1585
  %v1646 = vadd.f32 %v1579, %v1585
  %v1647 = vadd.f32 %v1580, %v1585
  %v1648 = vadd.f32 %v1581, %v1585
  %v1649 = vadd.f32 %v1582, %v1585
  %v1650 = vadd.f32 %v1583, %v1585
  %v1651 = vld [vmem:[%s3] sm:$0xff]
  %v1652 = vld [vmem:[%s3 + $0x8] sm:$0xff]
  %v1653 = vld [vmem:[%s3 + $0x10] sm:$0xff]
  %v1654 = vld [vmem:[%s3 + $0x18] sm:$0xff]
  %v1655 = vld [vmem:[%s3 + $0x20] sm:$0xff]
  %v1656 = vld [vmem:[%s3 + $0x28] sm:$0xff]
  %v1657 = vld [vmem:[%s3 + $0x30] sm:$0xff]
  %v1658 = vld [vmem:[%s3 + $0x38] sm:$0xff]
  %v1659 = vld [vmem:[%s4] sm:$0x1]
  %v1661 = vperm.slane %v1659, 0
  %v1664 = vsel %vm101, %v1587, 0
  %v1667 = vsel %vm101, %v1588, 0
  %v1670 = vsel %vm101, %v1589, 0
  %v1673 = vsel %vm101, %v1590, 0
  %v1676 = vsel %vm101, %v1591, 0
  %v1679 = vsel %vm101, %v1592, 0
  %v1682 = vsel %vm101, %v1593, 0
  %v1685 = vsel %vm101, %v1594, 0
  %v1688 = vsel %vm101, %v1595, 0
  %v1691 = vsel %vm101, %v1596, 0
  %v1694 = vsel %vm101, %v1597, 0
  %v1697 = vsel %vm101, %v1598, 0
  %v1700 = vsel %vm101, %v1599, 0
  %v1703 = vsel %vm101, %v1600, 0
  %v1706 = vsel %vm101, %v1601, 0
  %v1709 = vsel %vm101, %v1602, 0
  %v1712 = vsel %vm101, %v1603, 0
  %v1715 = vsel %vm101, %v1604, 0
  %v1718 = vsel %vm101, %v1605, 0
  %v1721 = vsel %vm101, %v1606, 0
  %v1724 = vsel %vm101, %v1607, 0
  %v1727 = vsel %vm101, %v1608, 0
  %v1730 = vsel %vm101, %v1609, 0
  %v1733 = vsel %vm101, %v1610, 0
  %v1736 = vsel %vm101, %v1611, 0
  %v1739 = vsel %vm101, %v1612, 0
  %v1742 = vsel %vm101, %v1613, 0
  %v1745 = vsel %vm101, %v1614, 0
  %v1748 = vsel %vm101, %v1615, 0
  %v1751 = vsel %vm101, %v1616, 0
  %v1754 = vsel %vm101, %v1617, 0
  %v1757 = vsel %vm101, %v1618, 0
  %v1760 = vsel %vm101, %v1619, 0
  %v1763 = vsel %vm101, %v1620, 0
  %v1766 = vsel %vm101, %v1621, 0
  %v1769 = vsel %vm101, %v1622, 0
  %v1772 = vsel %vm101, %v1623, 0
  %v1775 = vsel %vm101, %v1624, 0
  %v1778 = vsel %vm101, %v1625, 0
  %v1781 = vsel %vm101, %v1626, 0
  %v1784 = vsel %vm101, %v1627, 0
  %v1787 = vsel %vm101, %v1628, 0
  %v1790 = vsel %vm101, %v1629, 0
  %v1793 = vsel %vm101, %v1630, 0
  %v1796 = vsel %vm101, %v1631, 0
  %v1799 = vsel %vm101, %v1632, 0
  %v1802 = vsel %vm101, %v1633, 0
  %v1805 = vsel %vm101, %v1634, 0
  %v1808 = vsel %vm101, %v1635, 0
  %v1811 = vsel %vm101, %v1636, 0
  %v1814 = vsel %vm101, %v1637, 0
  %v1817 = vsel %vm101, %v1638, 0
  %v1820 = vsel %vm101, %v1639, 0
  %v1823 = vsel %vm101, %v1640, 0
  %v1826 = vsel %vm101, %v1641, 0
  %v1829 = vsel %vm101, %v1642, 0
  %v1832 = vsel %vm101, %v1643, 0
  %v1835 = vsel %vm101, %v1644, 0
  %v1838 = vsel %vm101, %v1645, 0
  %v1841 = vsel %vm101, %v1646, 0
  %v1844 = vsel %vm101, %v1647, 0
  %v1847 = vsel %vm101, %v1648, 0
  %v1850 = vsel %vm101, %v1649, 0
  %v1853 = vsel %vm101, %v1650, 0
  %1855 = vmatpush.msra.mxu0 0.0
  %1856 = vmatpush.msra.mxu0 0.0
  %1857 = vmatpush.msra.mxu0 0.0
  %1858 = vmatpush.msra.mxu0 0.0
  %1859 = vmatpush.msra.mxu0 0.0
  %1860 = vmatpush.msra.mxu0 0.0
  %1861 = vmatpush.msra.mxu0 0.0
  %1862 = vmatpush.msra.mxu0 0.0
  %1863 = vmatpush.msra.mxu0 %v1658
  %1864 = vmatpush.msra.mxu0 %v1657
  %1865 = vmatpush.msra.mxu0 %v1656
  %1866 = vmatpush.msra.mxu0 %v1655
  %1867 = vmatpush.msra.mxu0 %v1654
  %1868 = vmatpush.msra.mxu0 %v1653
  %1869 = vmatpush.msra.mxu0 %v1652
  %1870 = vmatpush.msra.mxu0 %v1651
  %1871 = vmatmul.f32.gmra.mxu0 %v1664
  %v1872 = vpop.f32.mrf.mxu0
  %v1873 = vadd.f32 %v1661, %v1872
  %1874 = vmatmul.f32.gmra.mxu0 %v1667
  %v1875 = vpop.f32.mrf.mxu0
  %v1876 = vadd.f32 %v1661, %v1875
  %1877 = vmatmul.f32.gmra.mxu0 %v1670
  %v1878 = vpop.f32.mrf.mxu0
  %v1879 = vadd.f32 %v1661, %v1878
  %1880 = vmatmul.f32.gmra.mxu0 %v1673
  %v1881 = vpop.f32.mrf.mxu0
  %v1882 = vadd.f32 %v1661, %v1881
  %1883 = vmatmul.f32.gmra.mxu0 %v1676
  %v1884 = vpop.f32.mrf.mxu0
  %v1885 = vadd.f32 %v1661, %v1884
  %1886 = vmatmul.f32.gmra.mxu0 %v1679
  %v1887 = vpop.f32.mrf.mxu0
  %v1888 = vadd.f32 %v1661, %v1887
  %1889 = vmatmul.f32.gmra.mxu0 %v1682
  %v1890 = vpop.f32.mrf.mxu0
  %v1891 = vadd.f32 %v1661, %v1890
  %1892 = vmatmul.f32.gmra.mxu0 %v1685
  %v1893 = vpop.f32.mrf.mxu0
  %v1894 = vadd.f32 %v1661, %v1893
  %1895 = vmatmul.f32.gmra.mxu0 %v1688
  %v1896 = vpop.f32.mrf.mxu0
  %v1897 = vadd.f32 %v1661, %v1896
  %1898 = vmatmul.f32.gmra.mxu0 %v1691
  %v1899 = vpop.f32.mrf.mxu0
  %v1900 = vadd.f32 %v1661, %v1899
  %1901 = vmatmul.f32.gmra.mxu0 %v1694
  %v1902 = vpop.f32.mrf.mxu0
  %v1903 = vadd.f32 %v1661, %v1902
  %1904 = vmatmul.f32.gmra.mxu0 %v1697
  %v1905 = vpop.f32.mrf.mxu0
  %v1906 = vadd.f32 %v1661, %v1905
  %1907 = vmatmul.f32.gmra.mxu0 %v1700
  %v1908 = vpop.f32.mrf.mxu0
  %v1909 = vadd.f32 %v1661, %v1908
  %1910 = vmatmul.f32.gmra.mxu0 %v1703
  %v1911 = vpop.f32.mrf.mxu0
  %v1912 = vadd.f32 %v1661, %v1911
  %1913 = vmatmul.f32.gmra.mxu0 %v1706
  %v1914 = vpop.f32.mrf.mxu0
  %v1915 = vadd.f32 %v1661, %v1914
  %1916 = vmatmul.f32.gmra.mxu0 %v1709
  %v1917 = vpop.f32.mrf.mxu0
  %v1918 = vadd.f32 %v1661, %v1917
  %1919 = vmatmul.f32.gmra.mxu0 %v1712
  %v1920 = vpop.f32.mrf.mxu0
  %v1921 = vadd.f32 %v1661, %v1920
  %1922 = vmatmul.f32.gmra.mxu0 %v1715
  %v1923 = vpop.f32.mrf.mxu0
  %v1924 = vadd.f32 %v1661, %v1923
  %1925 = vmatmul.f32.gmra.mxu0 %v1718
  %v1926 = vpop.f32.mrf.mxu0
  %v1927 = vadd.f32 %v1661, %v1926
  %1928 = vmatmul.f32.gmra.mxu0 %v1721
  %v1929 = vpop.f32.mrf.mxu0
  %v1930 = vadd.f32 %v1661, %v1929
  %1931 = vmatmul.f32.gmra.mxu0 %v1724
  %v1932 = vpop.f32.mrf.mxu0
  %v1933 = vadd.f32 %v1661, %v1932
  %1934 = vmatmul.f32.gmra.mxu0 %v1727
  %v1935 = vpop.f32.mrf.mxu0
  %v1936 = vadd.f32 %v1661, %v1935
  %1937 = vmatmul.f32.gmra.mxu0 %v1730
  %v1938 = vpop.f32.mrf.mxu0
  %v1939 = vadd.f32 %v1661, %v1938
  %1940 = vmatmul.f32.gmra.mxu0 %v1733
  %v1941 = vpop.f32.mrf.mxu0
  %v1942 = vadd.f32 %v1661, %v1941
  %1943 = vmatmul.f32.gmra.mxu0 %v1736
  %v1944 = vpop.f32.mrf.mxu0
  %v1945 = vadd.f32 %v1661, %v1944
  %1946 = vmatmul.f32.gmra.mxu0 %v1739
  %v1947 = vpop.f32.mrf.mxu0
  %v1948 = vadd.f32 %v1661, %v1947
  %1949 = vmatmul.f32.gmra.mxu0 %v1742
  %v1950 = vpop.f32.mrf.mxu0
  %v1951 = vadd.f32 %v1661, %v1950
  %1952 = vmatmul.f32.gmra.mxu0 %v1745
  %v1953 = vpop.f32.mrf.mxu0
  %v1954 = vadd.f32 %v1661, %v1953
  %1955 = vmatmul.f32.gmra.mxu0 %v1748
  %v1956 = vpop.f32.mrf.mxu0
  %v1957 = vadd.f32 %v1661, %v1956
  %1958 = vmatmul.f32.gmra.mxu0 %v1751
  %v1959 = vpop.f32.mrf.mxu0
  %v1960 = vadd.f32 %v1661, %v1959
  %1961 = vmatmul.f32.gmra.mxu0 %v1754
  %v1962 = vpop.f32.mrf.mxu0
  %v1963 = vadd.f32 %v1661, %v1962
  %1964 = vmatmul.f32.gmra.mxu0 %v1757
  %v1965 = vpop.f32.mrf.mxu0
  %v1966 = vadd.f32 %v1661, %v1965
  %1967 = vmatmul.f32.gmra.mxu0 %v1760
  %v1968 = vpop.f32.mrf.mxu0
  %v1969 = vadd.f32 %v1661, %v1968
  %1970 = vmatmul.f32.gmra.mxu0 %v1763
  %v1971 = vpop.f32.mrf.mxu0
  %v1972 = vadd.f32 %v1661, %v1971
  %1973 = vmatmul.f32.gmra.mxu0 %v1766
  %v1974 = vpop.f32.mrf.mxu0
  %v1975 = vadd.f32 %v1661, %v1974
  %1976 = vmatmul.f32.gmra.mxu0 %v1769
  %v1977 = vpop.f32.mrf.mxu0
  %v1978 = vadd.f32 %v1661, %v1977
  %1979 = vmatmul.f32.gmra.mxu0 %v1772
  %v1980 = vpop.f32.mrf.mxu0
  %v1981 = vadd.f32 %v1661, %v1980
  %1982 = vmatmul.f32.gmra.mxu0 %v1775
  %v1983 = vpop.f32.mrf.mxu0
  %v1984 = vadd.f32 %v1661, %v1983
  %1985 = vmatmul.f32.gmra.mxu0 %v1778
  %v1986 = vpop.f32.mrf.mxu0
  %v1987 = vadd.f32 %v1661, %v1986
  %1988 = vmatmul.f32.gmra.mxu0 %v1781
  %v1989 = vpop.f32.mrf.mxu0
  %v1990 = vadd.f32 %v1661, %v1989
  %1991 = vmatmul.f32.gmra.mxu0 %v1784
  %v1992 = vpop.f32.mrf.mxu0
  %v1993 = vadd.f32 %v1661, %v1992
  %1994 = vmatmul.f32.gmra.mxu0 %v1787
  %v1995 = vpop.f32.mrf.mxu0
  %v1996 = vadd.f32 %v1661, %v1995
  %1997 = vmatmul.f32.gmra.mxu0 %v1790
  %v1998 = vpop.f32.mrf.mxu0
  %v1999 = vadd.f32 %v1661, %v1998
  %2000 = vmatmul.f32.gmra.mxu0 %v1793
  %v2001 = vpop.f32.mrf.mxu0
  %v2002 = vadd.f32 %v1661, %v2001
  %2003 = vmatmul.f32.gmra.mxu0 %v1796
  %v2004 = vpop.f32.mrf.mxu0
  %v2005 = vadd.f32 %v1661, %v2004
  %2006 = vmatmul.f32.gmra.mxu0 %v1799
  %v2007 = vpop.f32.mrf.mxu0
  %v2008 = vadd.f32 %v1661, %v2007
  %2009 = vmatmul.f32.gmra.mxu0 %v1802
  %v2010 = vpop.f32.mrf.mxu0
  %v2011 = vadd.f32 %v1661, %v2010
  %2012 = vmatmul.f32.gmra.mxu0 %v1805
  %v2013 = vpop.f32.mrf.mxu0
  %v2014 = vadd.f32 %v1661, %v2013
  %2015 = vmatmul.f32.gmra.mxu0 %v1808
  %v2016 = vpop.f32.mrf.mxu0
  %v2017 = vadd.f32 %v1661, %v2016
  %2018 = vmatmul.f32.gmra.mxu0 %v1811
  %v2019 = vpop.f32.mrf.mxu0
  %v2020 = vadd.f32 %v1661, %v2019
  %2021 = vmatmul.f32.gmra.mxu0 %v1814
  %v2022 = vpop.f32.mrf.mxu0
  %v2023 = vadd.f32 %v1661, %v2022
  %2024 = vmatmul.f32.gmra.mxu0 %v1817
  %v2025 = vpop.f32.mrf.mxu0
  %v2026 = vadd.f32 %v1661, %v2025
  %2027 = vmatmul.f32.gmra.mxu0 %v1820
  %v2028 = vpop.f32.mrf.mxu0
  %v2029 = vadd.f32 %v1661, %v2028
  %2030 = vmatmul.f32.gmra.mxu0 %v1823
  %v2031 = vpop.f32.mrf.mxu0
  %v2032 = vadd.f32 %v1661, %v2031
  %2033 = vmatmul.f32.gmra.mxu0 %v1826
  %v2034 = vpop.f32.mrf.mxu0
  %v2035 = vadd.f32 %v1661, %v2034
  %2036 = vmatmul.f32.gmra.mxu0 %v1829
  %v2037 = vpop.f32.mrf.mxu0
  %v2038 = vadd.f32 %v1661, %v2037
  %2039 = vmatmul.f32.gmra.mxu0 %v1832
  %v2040 = vpop.f32.mrf.mxu0
  %v2041 = vadd.f32 %v1661, %v2040
  %2042 = vmatmul.f32.gmra.mxu0 %v1835
  %v2043 = vpop.f32.mrf.mxu0
  %v2044 = vadd.f32 %v1661, %v2043
  %2045 = vmatmul.f32.gmra.mxu0 %v1838
  %v2046 = vpop.f32.mrf.mxu0
  %v2047 = vadd.f32 %v1661, %v2046
  %2048 = vmatmul.f32.gmra.mxu0 %v1841
  %v2049 = vpop.f32.mrf.mxu0
  %v2050 = vadd.f32 %v1661, %v2049
  %2051 = vmatmul.f32.gmra.mxu0 %v1844
  %v2052 = vpop.f32.mrf.mxu0
  %v2053 = vadd.f32 %v1661, %v2052
  %2054 = vmatmul.f32.gmra.mxu0 %v1847
  %v2055 = vpop.f32.mrf.mxu0
  %v2056 = vadd.f32 %v1661, %v2055
  %2057 = vmatmul.f32.gmra.mxu0 %v1850
  %v2058 = vpop.f32.mrf.mxu0
  %v2059 = vadd.f32 %v1661, %v2058
  %2060 = vmatmul.f32.gmra.mxu0 %v1853
  %v2061 = vpop.f32.mrf.mxu0
  %v2062 = vadd.f32 %v1661, %v2061
  %2063 = vdwg.mxu0
  %v2064 = vld [vmem:[%s5] sm:$0xff]
  %v2065 = vld [vmem:[%s5 + $0x8] sm:$0xff]
  %v2066 = vld [vmem:[%s5 + $0x10] sm:$0xff]
  %v2067 = vld [vmem:[%s5 + $0x18] sm:$0xff]
  %v2068 = vld [vmem:[%s5 + $0x20] sm:$0xff]
  %v2069 = vld [vmem:[%s5 + $0x28] sm:$0xff]
  %v2070 = vld [vmem:[%s5 + $0x30] sm:$0xff]
  %v2071 = vld [vmem:[%s5 + $0x38] sm:$0xff]
  %v2072 = vld [vmem:[%s6] sm:$0x1]
  %v2074 = vperm.slane %v2072, 0
  %2076 = vmatpush.msra.mxu0 0.0
  %2077 = vmatpush.msra.mxu0 0.0
  %2078 = vmatpush.msra.mxu0 0.0
  %2079 = vmatpush.msra.mxu0 0.0
  %2080 = vmatpush.msra.mxu0 0.0
  %2081 = vmatpush.msra.mxu0 0.0
  %2082 = vmatpush.msra.mxu0 0.0
  %2083 = vmatpush.msra.mxu0 0.0
  %2084 = vmatpush.msra.mxu0 %v2071
  %2085 = vmatpush.msra.mxu0 %v2070
  %2086 = vmatpush.msra.mxu0 %v2069
  %2087 = vmatpush.msra.mxu0 %v2068
  %2088 = vmatpush.msra.mxu0 %v2067
  %2089 = vmatpush.msra.mxu0 %v2066
  %2090 = vmatpush.msra.mxu0 %v2065
  %2091 = vmatpush.msra.mxu0 %v2064
  %2092 = vmatmul.f32.gmra.mxu0 %v1664
  %v2093 = vpop.f32.mrf.mxu0
  %v2094 = vadd.f32 %v2074, %v2093
  %2095 = vmatmul.f32.gmra.mxu0 %v1667
  %v2096 = vpop.f32.mrf.mxu0
  %v2097 = vadd.f32 %v2074, %v2096
  %2098 = vmatmul.f32.gmra.mxu0 %v1670
  %v2099 = vpop.f32.mrf.mxu0
  %v2100 = vadd.f32 %v2074, %v2099
  %2101 = vmatmul.f32.gmra.mxu0 %v1673
  %v2102 = vpop.f32.mrf.mxu0
  %v2103 = vadd.f32 %v2074, %v2102
  %2104 = vmatmul.f32.gmra.mxu0 %v1676
  %v2105 = vpop.f32.mrf.mxu0
  %v2106 = vadd.f32 %v2074, %v2105
  %2107 = vmatmul.f32.gmra.mxu0 %v1679
  %v2108 = vpop.f32.mrf.mxu0
  %v2109 = vadd.f32 %v2074, %v2108
  %2110 = vmatmul.f32.gmra.mxu0 %v1682
  %v2111 = vpop.f32.mrf.mxu0
  %v2112 = vadd.f32 %v2074, %v2111
  %2113 = vmatmul.f32.gmra.mxu0 %v1685
  %v2114 = vpop.f32.mrf.mxu0
  %v2115 = vadd.f32 %v2074, %v2114
  %2116 = vmatmul.f32.gmra.mxu0 %v1688
  %v2117 = vpop.f32.mrf.mxu0
  %v2118 = vadd.f32 %v2074, %v2117
  %2119 = vmatmul.f32.gmra.mxu0 %v1691
  %v2120 = vpop.f32.mrf.mxu0
  %v2121 = vadd.f32 %v2074, %v2120
  %2122 = vmatmul.f32.gmra.mxu0 %v1694
  %v2123 = vpop.f32.mrf.mxu0
  %v2124 = vadd.f32 %v2074, %v2123
  %2125 = vmatmul.f32.gmra.mxu0 %v1697
  %v2126 = vpop.f32.mrf.mxu0
  %v2127 = vadd.f32 %v2074, %v2126
  %2128 = vmatmul.f32.gmra.mxu0 %v1700
  %v2129 = vpop.f32.mrf.mxu0
  %v2130 = vadd.f32 %v2074, %v2129
  %2131 = vmatmul.f32.gmra.mxu0 %v1703
  %v2132 = vpop.f32.mrf.mxu0
  %v2133 = vadd.f32 %v2074, %v2132
  %2134 = vmatmul.f32.gmra.mxu0 %v1706
  %v2135 = vpop.f32.mrf.mxu0
  %v2136 = vadd.f32 %v2074, %v2135
  %2137 = vmatmul.f32.gmra.mxu0 %v1709
  %v2138 = vpop.f32.mrf.mxu0
  %v2139 = vadd.f32 %v2074, %v2138
  %2140 = vmatmul.f32.gmra.mxu0 %v1712
  %v2141 = vpop.f32.mrf.mxu0
  %v2142 = vadd.f32 %v2074, %v2141
  %2143 = vmatmul.f32.gmra.mxu0 %v1715
  %v2144 = vpop.f32.mrf.mxu0
  %v2145 = vadd.f32 %v2074, %v2144
  %2146 = vmatmul.f32.gmra.mxu0 %v1718
  %v2147 = vpop.f32.mrf.mxu0
  %v2148 = vadd.f32 %v2074, %v2147
  %2149 = vmatmul.f32.gmra.mxu0 %v1721
  %v2150 = vpop.f32.mrf.mxu0
  %v2151 = vadd.f32 %v2074, %v2150
  %2152 = vmatmul.f32.gmra.mxu0 %v1724
  %v2153 = vpop.f32.mrf.mxu0
  %v2154 = vadd.f32 %v2074, %v2153
  %2155 = vmatmul.f32.gmra.mxu0 %v1727
  %v2156 = vpop.f32.mrf.mxu0
  %v2157 = vadd.f32 %v2074, %v2156
  %2158 = vmatmul.f32.gmra.mxu0 %v1730
  %v2159 = vpop.f32.mrf.mxu0
  %v2160 = vadd.f32 %v2074, %v2159
  %2161 = vmatmul.f32.gmra.mxu0 %v1733
  %v2162 = vpop.f32.mrf.mxu0
  %v2163 = vadd.f32 %v2074, %v2162
  %2164 = vmatmul.f32.gmra.mxu0 %v1736
  %v2165 = vpop.f32.mrf.mxu0
  %v2166 = vadd.f32 %v2074, %v2165
  %2167 = vmatmul.f32.gmra.mxu0 %v1739
  %v2168 = vpop.f32.mrf.mxu0
  %v2169 = vadd.f32 %v2074, %v2168
  %2170 = vmatmul.f32.gmra.mxu0 %v1742
  %v2171 = vpop.f32.mrf.mxu0
  %v2172 = vadd.f32 %v2074, %v2171
  %2173 = vmatmul.f32.gmra.mxu0 %v1745
  %v2174 = vpop.f32.mrf.mxu0
  %v2175 = vadd.f32 %v2074, %v2174
  %2176 = vmatmul.f32.gmra.mxu0 %v1748
  %v2177 = vpop.f32.mrf.mxu0
  %v2178 = vadd.f32 %v2074, %v2177
  %2179 = vmatmul.f32.gmra.mxu0 %v1751
  %v2180 = vpop.f32.mrf.mxu0
  %v2181 = vadd.f32 %v2074, %v2180
  %2182 = vmatmul.f32.gmra.mxu0 %v1754
  %v2183 = vpop.f32.mrf.mxu0
  %v2184 = vadd.f32 %v2074, %v2183
  %2185 = vmatmul.f32.gmra.mxu0 %v1757
  %v2186 = vpop.f32.mrf.mxu0
  %v2187 = vadd.f32 %v2074, %v2186
  %2188 = vmatmul.f32.gmra.mxu0 %v1760
  %v2189 = vpop.f32.mrf.mxu0
  %v2190 = vadd.f32 %v2074, %v2189
  %2191 = vmatmul.f32.gmra.mxu0 %v1763
  %v2192 = vpop.f32.mrf.mxu0
  %v2193 = vadd.f32 %v2074, %v2192
  %2194 = vmatmul.f32.gmra.mxu0 %v1766
  %v2195 = vpop.f32.mrf.mxu0
  %v2196 = vadd.f32 %v2074, %v2195
  %2197 = vmatmul.f32.gmra.mxu0 %v1769
  %v2198 = vpop.f32.mrf.mxu0
  %v2199 = vadd.f32 %v2074, %v2198
  %2200 = vmatmul.f32.gmra.mxu0 %v1772
  %v2201 = vpop.f32.mrf.mxu0
  %v2202 = vadd.f32 %v2074, %v2201
  %2203 = vmatmul.f32.gmra.mxu0 %v1775
  %v2204 = vpop.f32.mrf.mxu0
  %v2205 = vadd.f32 %v2074, %v2204
  %2206 = vmatmul.f32.gmra.mxu0 %v1778
  %v2207 = vpop.f32.mrf.mxu0
  %v2208 = vadd.f32 %v2074, %v2207
  %2209 = vmatmul.f32.gmra.mxu0 %v1781
  %v2210 = vpop.f32.mrf.mxu0
  %v2211 = vadd.f32 %v2074, %v2210
  %2212 = vmatmul.f32.gmra.mxu0 %v1784
  %v2213 = vpop.f32.mrf.mxu0
  %v2214 = vadd.f32 %v2074, %v2213
  %2215 = vmatmul.f32.gmra.mxu0 %v1787
  %v2216 = vpop.f32.mrf.mxu0
  %v2217 = vadd.f32 %v2074, %v2216
  %2218 = vmatmul.f32.gmra.mxu0 %v1790
  %v2219 = vpop.f32.mrf.mxu0
  %v2220 = vadd.f32 %v2074, %v2219
  %2221 = vmatmul.f32.gmra.mxu0 %v1793
  %v2222 = vpop.f32.mrf.mxu0
  %v2223 = vadd.f32 %v2074, %v2222
  %2224 = vmatmul.f32.gmra.mxu0 %v1796
  %v2225 = vpop.f32.mrf.mxu0
  %v2226 = vadd.f32 %v2074, %v2225
  %2227 = vmatmul.f32.gmra.mxu0 %v1799
  %v2228 = vpop.f32.mrf.mxu0
  %v2229 = vadd.f32 %v2074, %v2228
  %2230 = vmatmul.f32.gmra.mxu0 %v1802
  %v2231 = vpop.f32.mrf.mxu0
  %v2232 = vadd.f32 %v2074, %v2231
  %2233 = vmatmul.f32.gmra.mxu0 %v1805
  %v2234 = vpop.f32.mrf.mxu0
  %v2235 = vadd.f32 %v2074, %v2234
  %2236 = vmatmul.f32.gmra.mxu0 %v1808
  %v2237 = vpop.f32.mrf.mxu0
  %v2238 = vadd.f32 %v2074, %v2237
  %2239 = vmatmul.f32.gmra.mxu0 %v1811
  %v2240 = vpop.f32.mrf.mxu0
  %v2241 = vadd.f32 %v2074, %v2240
  %2242 = vmatmul.f32.gmra.mxu0 %v1814
  %v2243 = vpop.f32.mrf.mxu0
  %v2244 = vadd.f32 %v2074, %v2243
  %2245 = vmatmul.f32.gmra.mxu0 %v1817
  %v2246 = vpop.f32.mrf.mxu0
  %v2247 = vadd.f32 %v2074, %v2246
  %2248 = vmatmul.f32.gmra.mxu0 %v1820
  %v2249 = vpop.f32.mrf.mxu0
  %v2250 = vadd.f32 %v2074, %v2249
  %2251 = vmatmul.f32.gmra.mxu0 %v1823
  %v2252 = vpop.f32.mrf.mxu0
  %v2253 = vadd.f32 %v2074, %v2252
  %2254 = vmatmul.f32.gmra.mxu0 %v1826
  %v2255 = vpop.f32.mrf.mxu0
  %v2256 = vadd.f32 %v2074, %v2255
  %2257 = vmatmul.f32.gmra.mxu0 %v1829
  %v2258 = vpop.f32.mrf.mxu0
  %v2259 = vadd.f32 %v2074, %v2258
  %2260 = vmatmul.f32.gmra.mxu0 %v1832
  %v2261 = vpop.f32.mrf.mxu0
  %v2262 = vadd.f32 %v2074, %v2261
  %2263 = vmatmul.f32.gmra.mxu0 %v1835
  %v2264 = vpop.f32.mrf.mxu0
  %v2265 = vadd.f32 %v2074, %v2264
  %2266 = vmatmul.f32.gmra.mxu0 %v1838
  %v2267 = vpop.f32.mrf.mxu0
  %v2268 = vadd.f32 %v2074, %v2267
  %2269 = vmatmul.f32.gmra.mxu0 %v1841
  %v2270 = vpop.f32.mrf.mxu0
  %v2271 = vadd.f32 %v2074, %v2270
  %2272 = vmatmul.f32.gmra.mxu0 %v1844
  %v2273 = vpop.f32.mrf.mxu0
  %v2274 = vadd.f32 %v2074, %v2273
  %2275 = vmatmul.f32.gmra.mxu0 %v1847
  %v2276 = vpop.f32.mrf.mxu0
  %v2277 = vadd.f32 %v2074, %v2276
  %2278 = vmatmul.f32.gmra.mxu0 %v1850
  %v2279 = vpop.f32.mrf.mxu0
  %v2280 = vadd.f32 %v2074, %v2279
  %2281 = vmatmul.f32.gmra.mxu0 %v1853
  %v2282 = vpop.f32.mrf.mxu0
  %v2283 = vadd.f32 %v2074, %v2282
  %2284 = vdwg.mxu0
  %v2285 = vld [vmem:[%s7] sm:$0xff]
  %v2286 = vld [vmem:[%s7 + $0x8] sm:$0xff]
  %v2287 = vld [vmem:[%s7 + $0x10] sm:$0xff]
  %v2288 = vld [vmem:[%s7 + $0x18] sm:$0xff]
  %v2289 = vld [vmem:[%s7 + $0x20] sm:$0xff]
  %v2290 = vld [vmem:[%s7 + $0x28] sm:$0xff]
  %v2291 = vld [vmem:[%s7 + $0x30] sm:$0xff]
  %v2292 = vld [vmem:[%s7 + $0x38] sm:$0xff]
  %v2293 = vld [vmem:[%s8] sm:$0x1]
  %v2295 = vperm.slane %v2293, 0
  %2297 = vmatpush.msra.mxu0 0.0
  %2298 = vmatpush.msra.mxu0 0.0
  %2299 = vmatpush.msra.mxu0 0.0
  %2300 = vmatpush.msra.mxu0 0.0
  %2301 = vmatpush.msra.mxu0 0.0
  %2302 = vmatpush.msra.mxu0 0.0
  %2303 = vmatpush.msra.mxu0 0.0
  %2304 = vmatpush.msra.mxu0 0.0
  %2305 = vmatpush.msra.mxu0 %v2292
  %2306 = vmatpush.msra.mxu0 %v2291
  %2307 = vmatpush.msra.mxu0 %v2290
  %2308 = vmatpush.msra.mxu0 %v2289
  %2309 = vmatpush.msra.mxu0 %v2288
  %2310 = vmatpush.msra.mxu0 %v2287
  %2311 = vmatpush.msra.mxu0 %v2286
  %2312 = vmatpush.msra.mxu0 %v2285
  %2313 = vmatmul.f32.gmra.mxu0 %v1664
  %v2314 = vpop.f32.mrf.mxu0
  %v2315 = vadd.f32 %v2295, %v2314
  %2316 = vmatmul.f32.gmra.mxu0 %v1667
  %v2317 = vpop.f32.mrf.mxu0
  %v2318 = vadd.f32 %v2295, %v2317
  %2319 = vmatmul.f32.gmra.mxu0 %v1670
  %v2320 = vpop.f32.mrf.mxu0
  %v2321 = vadd.f32 %v2295, %v2320
  %2322 = vmatmul.f32.gmra.mxu0 %v1673
  %v2323 = vpop.f32.mrf.mxu0
  %v2324 = vadd.f32 %v2295, %v2323
  %2325 = vmatmul.f32.gmra.mxu0 %v1676
  %v2326 = vpop.f32.mrf.mxu0
  %v2327 = vadd.f32 %v2295, %v2326
  %2328 = vmatmul.f32.gmra.mxu0 %v1679
  %v2329 = vpop.f32.mrf.mxu0
  %v2330 = vadd.f32 %v2295, %v2329
  %2331 = vmatmul.f32.gmra.mxu0 %v1682
  %v2332 = vpop.f32.mrf.mxu0
  %v2333 = vadd.f32 %v2295, %v2332
  %2334 = vmatmul.f32.gmra.mxu0 %v1685
  %v2335 = vpop.f32.mrf.mxu0
  %v2336 = vadd.f32 %v2295, %v2335
  %2337 = vmatmul.f32.gmra.mxu0 %v1688
  %v2338 = vpop.f32.mrf.mxu0
  %v2339 = vadd.f32 %v2295, %v2338
  %2340 = vmatmul.f32.gmra.mxu0 %v1691
  %v2341 = vpop.f32.mrf.mxu0
  %v2342 = vadd.f32 %v2295, %v2341
  %2343 = vmatmul.f32.gmra.mxu0 %v1694
  %v2344 = vpop.f32.mrf.mxu0
  %v2345 = vadd.f32 %v2295, %v2344
  %2346 = vmatmul.f32.gmra.mxu0 %v1697
  %v2347 = vpop.f32.mrf.mxu0
  %v2348 = vadd.f32 %v2295, %v2347
  %2349 = vmatmul.f32.gmra.mxu0 %v1700
  %v2350 = vpop.f32.mrf.mxu0
  %v2351 = vadd.f32 %v2295, %v2350
  %2352 = vmatmul.f32.gmra.mxu0 %v1703
  %v2353 = vpop.f32.mrf.mxu0
  %v2354 = vadd.f32 %v2295, %v2353
  %2355 = vmatmul.f32.gmra.mxu0 %v1706
  %v2356 = vpop.f32.mrf.mxu0
  %v2357 = vadd.f32 %v2295, %v2356
  %2358 = vmatmul.f32.gmra.mxu0 %v1709
  %v2359 = vpop.f32.mrf.mxu0
  %v2360 = vadd.f32 %v2295, %v2359
  %2361 = vmatmul.f32.gmra.mxu0 %v1712
  %v2362 = vpop.f32.mrf.mxu0
  %v2363 = vadd.f32 %v2295, %v2362
  %2364 = vmatmul.f32.gmra.mxu0 %v1715
  %v2365 = vpop.f32.mrf.mxu0
  %v2366 = vadd.f32 %v2295, %v2365
  %2367 = vmatmul.f32.gmra.mxu0 %v1718
  %v2368 = vpop.f32.mrf.mxu0
  %v2369 = vadd.f32 %v2295, %v2368
  %2370 = vmatmul.f32.gmra.mxu0 %v1721
  %v2371 = vpop.f32.mrf.mxu0
  %v2372 = vadd.f32 %v2295, %v2371
  %2373 = vmatmul.f32.gmra.mxu0 %v1724
  %v2374 = vpop.f32.mrf.mxu0
  %v2375 = vadd.f32 %v2295, %v2374
  %2376 = vmatmul.f32.gmra.mxu0 %v1727
  %v2377 = vpop.f32.mrf.mxu0
  %v2378 = vadd.f32 %v2295, %v2377
  %2379 = vmatmul.f32.gmra.mxu0 %v1730
  %v2380 = vpop.f32.mrf.mxu0
  %v2381 = vadd.f32 %v2295, %v2380
  %2382 = vmatmul.f32.gmra.mxu0 %v1733
  %v2383 = vpop.f32.mrf.mxu0
  %v2384 = vadd.f32 %v2295, %v2383
  %2385 = vmatmul.f32.gmra.mxu0 %v1736
  %v2386 = vpop.f32.mrf.mxu0
  %v2387 = vadd.f32 %v2295, %v2386
  %2388 = vmatmul.f32.gmra.mxu0 %v1739
  %v2389 = vpop.f32.mrf.mxu0
  %v2390 = vadd.f32 %v2295, %v2389
  %2391 = vmatmul.f32.gmra.mxu0 %v1742
  %v2392 = vpop.f32.mrf.mxu0
  %v2393 = vadd.f32 %v2295, %v2392
  %2394 = vmatmul.f32.gmra.mxu0 %v1745
  %v2395 = vpop.f32.mrf.mxu0
  %v2396 = vadd.f32 %v2295, %v2395
  %2397 = vmatmul.f32.gmra.mxu0 %v1748
  %v2398 = vpop.f32.mrf.mxu0
  %v2399 = vadd.f32 %v2295, %v2398
  %2400 = vmatmul.f32.gmra.mxu0 %v1751
  %v2401 = vpop.f32.mrf.mxu0
  %v2402 = vadd.f32 %v2295, %v2401
  %2403 = vmatmul.f32.gmra.mxu0 %v1754
  %v2404 = vpop.f32.mrf.mxu0
  %v2405 = vadd.f32 %v2295, %v2404
  %2406 = vmatmul.f32.gmra.mxu0 %v1757
  %v2407 = vpop.f32.mrf.mxu0
  %v2408 = vadd.f32 %v2295, %v2407
  %2409 = vmatmul.f32.gmra.mxu0 %v1760
  %v2410 = vpop.f32.mrf.mxu0
  %v2411 = vadd.f32 %v2295, %v2410
  %2412 = vmatmul.f32.gmra.mxu0 %v1763
  %v2413 = vpop.f32.mrf.mxu0
  %v2414 = vadd.f32 %v2295, %v2413
  %2415 = vmatmul.f32.gmra.mxu0 %v1766
  %v2416 = vpop.f32.mrf.mxu0
  %v2417 = vadd.f32 %v2295, %v2416
  %2418 = vmatmul.f32.gmra.mxu0 %v1769
  %v2419 = vpop.f32.mrf.mxu0
  %v2420 = vadd.f32 %v2295, %v2419
  %2421 = vmatmul.f32.gmra.mxu0 %v1772
  %v2422 = vpop.f32.mrf.mxu0
  %v2423 = vadd.f32 %v2295, %v2422
  %2424 = vmatmul.f32.gmra.mxu0 %v1775
  %v2425 = vpop.f32.mrf.mxu0
  %v2426 = vadd.f32 %v2295, %v2425
  %2427 = vmatmul.f32.gmra.mxu0 %v1778
  %v2428 = vpop.f32.mrf.mxu0
  %v2429 = vadd.f32 %v2295, %v2428
  %2430 = vmatmul.f32.gmra.mxu0 %v1781
  %v2431 = vpop.f32.mrf.mxu0
  %v2432 = vadd.f32 %v2295, %v2431
  %2433 = vmatmul.f32.gmra.mxu0 %v1784
  %v2434 = vpop.f32.mrf.mxu0
  %v2435 = vadd.f32 %v2295, %v2434
  %2436 = vmatmul.f32.gmra.mxu0 %v1787
  %v2437 = vpop.f32.mrf.mxu0
  %v2438 = vadd.f32 %v2295, %v2437
  %2439 = vmatmul.f32.gmra.mxu0 %v1790
  %v2440 = vpop.f32.mrf.mxu0
  %v2441 = vadd.f32 %v2295, %v2440
  %2442 = vmatmul.f32.gmra.mxu0 %v1793
  %v2443 = vpop.f32.mrf.mxu0
  %v2444 = vadd.f32 %v2295, %v2443
  %2445 = vmatmul.f32.gmra.mxu0 %v1796
  %v2446 = vpop.f32.mrf.mxu0
  %v2447 = vadd.f32 %v2295, %v2446
  %2448 = vmatmul.f32.gmra.mxu0 %v1799
  %v2449 = vpop.f32.mrf.mxu0
  %v2450 = vadd.f32 %v2295, %v2449
  %2451 = vmatmul.f32.gmra.mxu0 %v1802
  %v2452 = vpop.f32.mrf.mxu0
  %v2453 = vadd.f32 %v2295, %v2452
  %2454 = vmatmul.f32.gmra.mxu0 %v1805
  %v2455 = vpop.f32.mrf.mxu0
  %v2456 = vadd.f32 %v2295, %v2455
  %2457 = vmatmul.f32.gmra.mxu0 %v1808
  %v2458 = vpop.f32.mrf.mxu0
  %v2459 = vadd.f32 %v2295, %v2458
  %2460 = vmatmul.f32.gmra.mxu0 %v1811
  %v2461 = vpop.f32.mrf.mxu0
  %v2462 = vadd.f32 %v2295, %v2461
  %2463 = vmatmul.f32.gmra.mxu0 %v1814
  %v2464 = vpop.f32.mrf.mxu0
  %v2465 = vadd.f32 %v2295, %v2464
  %2466 = vmatmul.f32.gmra.mxu0 %v1817
  %v2467 = vpop.f32.mrf.mxu0
  %v2468 = vadd.f32 %v2295, %v2467
  %2469 = vmatmul.f32.gmra.mxu0 %v1820
  %v2470 = vpop.f32.mrf.mxu0
  %v2471 = vadd.f32 %v2295, %v2470
  %2472 = vmatmul.f32.gmra.mxu0 %v1823
  %v2473 = vpop.f32.mrf.mxu0
  %v2474 = vadd.f32 %v2295, %v2473
  %2475 = vmatmul.f32.gmra.mxu0 %v1826
  %v2476 = vpop.f32.mrf.mxu0
  %v2477 = vadd.f32 %v2295, %v2476
  %2478 = vmatmul.f32.gmra.mxu0 %v1829
  %v2479 = vpop.f32.mrf.mxu0
  %v2480 = vadd.f32 %v2295, %v2479
  %2481 = vmatmul.f32.gmra.mxu0 %v1832
  %v2482 = vpop.f32.mrf.mxu0
  %v2483 = vadd.f32 %v2295, %v2482
  %2484 = vmatmul.f32.gmra.mxu0 %v1835
  %v2485 = vpop.f32.mrf.mxu0
  %v2486 = vadd.f32 %v2295, %v2485
  %2487 = vmatmul.f32.gmra.mxu0 %v1838
  %v2488 = vpop.f32.mrf.mxu0
  %v2489 = vadd.f32 %v2295, %v2488
  %2490 = vmatmul.f32.gmra.mxu0 %v1841
  %v2491 = vpop.f32.mrf.mxu0
  %v2492 = vadd.f32 %v2295, %v2491
  %2493 = vmatmul.f32.gmra.mxu0 %v1844
  %v2494 = vpop.f32.mrf.mxu0
  %v2495 = vadd.f32 %v2295, %v2494
  %2496 = vmatmul.f32.gmra.mxu0 %v1847
  %v2497 = vpop.f32.mrf.mxu0
  %v2498 = vadd.f32 %v2295, %v2497
  %2499 = vmatmul.f32.gmra.mxu0 %v1850
  %v2500 = vpop.f32.mrf.mxu0
  %v2501 = vadd.f32 %v2295, %v2500
  %2502 = vmatmul.f32.gmra.mxu0 %v1853
  %v2503 = vpop.f32.mrf.mxu0
  %v2504 = vadd.f32 %v2295, %v2503
  %2505 = vdwg.mxu0
  %v2506 = vmul.f32 %v1873, 0.25
  %v2507 = vmul.f32 %v1876, 0.25
  %v2508 = vmul.f32 %v1879, 0.25
  %v2509 = vmul.f32 %v1882, 0.25
  %v2510 = vmul.f32 %v1885, 0.25
  %v2511 = vmul.f32 %v1888, 0.25
  %v2512 = vmul.f32 %v1891, 0.25
  %v2513 = vmul.f32 %v1894, 0.25
  %v2514 = vmul.f32 %v1897, 0.25
  %v2515 = vmul.f32 %v1900, 0.25
  %v2516 = vmul.f32 %v1903, 0.25
  %v2517 = vmul.f32 %v1906, 0.25
  %v2518 = vmul.f32 %v1909, 0.25
  %v2519 = vmul.f32 %v1912, 0.25
  %v2520 = vmul.f32 %v1915, 0.25
  %v2521 = vmul.f32 %v1918, 0.25
  %v2522 = vmul.f32 %v1921, 0.25
  %v2523 = vmul.f32 %v1924, 0.25
  %v2524 = vmul.f32 %v1927, 0.25
  %v2525 = vmul.f32 %v1930, 0.25
  %v2526 = vmul.f32 %v1933, 0.25
  %v2527 = vmul.f32 %v1936, 0.25
  %v2528 = vmul.f32 %v1939, 0.25
  %v2529 = vmul.f32 %v1942, 0.25
  %v2530 = vmul.f32 %v1945, 0.25
  %v2531 = vmul.f32 %v1948, 0.25
  %v2532 = vmul.f32 %v1951, 0.25
  %v2533 = vmul.f32 %v1954, 0.25
  %v2534 = vmul.f32 %v1957, 0.25
  %v2535 = vmul.f32 %v1960, 0.25
  %v2536 = vmul.f32 %v1963, 0.25
  %v2537 = vmul.f32 %v1966, 0.25
  %v2538 = vmul.f32 %v1969, 0.25
  %v2539 = vmul.f32 %v1972, 0.25
  %v2540 = vmul.f32 %v1975, 0.25
  %v2541 = vmul.f32 %v1978, 0.25
  %v2542 = vmul.f32 %v1981, 0.25
  %v2543 = vmul.f32 %v1984, 0.25
  %v2544 = vmul.f32 %v1987, 0.25
  %v2545 = vmul.f32 %v1990, 0.25
  %v2546 = vmul.f32 %v1993, 0.25
  %v2547 = vmul.f32 %v1996, 0.25
  %v2548 = vmul.f32 %v1999, 0.25
  %v2549 = vmul.f32 %v2002, 0.25
  %v2550 = vmul.f32 %v2005, 0.25
  %v2551 = vmul.f32 %v2008, 0.25
  %v2552 = vmul.f32 %v2011, 0.25
  %v2553 = vmul.f32 %v2014, 0.25
  %v2554 = vmul.f32 %v2017, 0.25
  %v2555 = vmul.f32 %v2020, 0.25
  %v2556 = vmul.f32 %v2023, 0.25
  %v2557 = vmul.f32 %v2026, 0.25
  %v2558 = vmul.f32 %v2029, 0.25
  %v2559 = vmul.f32 %v2032, 0.25
  %v2560 = vmul.f32 %v2035, 0.25
  %v2561 = vmul.f32 %v2038, 0.25
  %v2562 = vmul.f32 %v2041, 0.25
  %v2563 = vmul.f32 %v2044, 0.25
  %v2564 = vmul.f32 %v2047, 0.25
  %v2565 = vmul.f32 %v2050, 0.25
  %v2566 = vmul.f32 %v2053, 0.25
  %v2567 = vmul.f32 %v2056, 0.25
  %v2568 = vmul.f32 %v2059, 0.25
  %v2569 = vmul.f32 %v2062, 0.25
  %2570 = vst.msk [vmem:[%s9] sm:$0xff] %vm101, %v2506
  %2571 = vst.msk [vmem:[%s9 + $0x8] sm:$0xff] %vm101, %v2507
  %2572 = vst.msk [vmem:[%s9 + $0x10] sm:$0xff] %vm101, %v2508
  %2573 = vst.msk [vmem:[%s9 + $0x18] sm:$0xff] %vm101, %v2509
  %2574 = vst.msk [vmem:[%s9 + $0x20] sm:$0xff] %vm101, %v2510
  %2575 = vst.msk [vmem:[%s9 + $0x28] sm:$0xff] %vm101, %v2511
  %2576 = vst.msk [vmem:[%s9 + $0x30] sm:$0xff] %vm101, %v2512
  %2577 = vst.msk [vmem:[%s9 + $0x38] sm:$0xff] %vm101, %v2513
  %2578 = vst.msk [vmem:[%s9 + $0x40] sm:$0xff] %vm101, %v2514
  %2579 = vst.msk [vmem:[%s9 + $0x48] sm:$0xff] %vm101, %v2515
  %2580 = vst.msk [vmem:[%s9 + $0x50] sm:$0xff] %vm101, %v2516
  %2581 = vst.msk [vmem:[%s9 + $0x58] sm:$0xff] %vm101, %v2517
  %2582 = vst.msk [vmem:[%s9 + $0x60] sm:$0xff] %vm101, %v2518
  %2583 = vst.msk [vmem:[%s9 + $0x68] sm:$0xff] %vm101, %v2519
  %2584 = vst.msk [vmem:[%s9 + $0x70] sm:$0xff] %vm101, %v2520
  %2585 = vst.msk [vmem:[%s9 + $0x78] sm:$0xff] %vm101, %v2521
  %2586 = vst.msk [vmem:[%s9 + $0x80] sm:$0xff] %vm101, %v2522
  %2587 = vst.msk [vmem:[%s9 + $0x88] sm:$0xff] %vm101, %v2523
  %2588 = vst.msk [vmem:[%s9 + $0x90] sm:$0xff] %vm101, %v2524
  %2589 = vst.msk [vmem:[%s9 + $0x98] sm:$0xff] %vm101, %v2525
  %2590 = vst.msk [vmem:[%s9 + $0xa0] sm:$0xff] %vm101, %v2526
  %2591 = vst.msk [vmem:[%s9 + $0xa8] sm:$0xff] %vm101, %v2527
  %2592 = vst.msk [vmem:[%s9 + $0xb0] sm:$0xff] %vm101, %v2528
  %2593 = vst.msk [vmem:[%s9 + $0xb8] sm:$0xff] %vm101, %v2529
  %2594 = vst.msk [vmem:[%s9 + $0xc0] sm:$0xff] %vm101, %v2530
  %2595 = vst.msk [vmem:[%s9 + $0xc8] sm:$0xff] %vm101, %v2531
  %2596 = vst.msk [vmem:[%s9 + $0xd0] sm:$0xff] %vm101, %v2532
  %2597 = vst.msk [vmem:[%s9 + $0xd8] sm:$0xff] %vm101, %v2533
  %2598 = vst.msk [vmem:[%s9 + $0xe0] sm:$0xff] %vm101, %v2534
  %2599 = vst.msk [vmem:[%s9 + $0xe8] sm:$0xff] %vm101, %v2535
  %2600 = vst.msk [vmem:[%s9 + $0xf0] sm:$0xff] %vm101, %v2536
  %2601 = vst.msk [vmem:[%s9 + $0xf8] sm:$0xff] %vm101, %v2537
  %2602 = vst.msk [vmem:[%s9 + $0x100] sm:$0xff] %vm101, %v2538
  %2603 = vst.msk [vmem:[%s9 + $0x108] sm:$0xff] %vm101, %v2539
  %2604 = vst.msk [vmem:[%s9 + $0x110] sm:$0xff] %vm101, %v2540
  %2605 = vst.msk [vmem:[%s9 + $0x118] sm:$0xff] %vm101, %v2541
  %2606 = vst.msk [vmem:[%s9 + $0x120] sm:$0xff] %vm101, %v2542
  %2607 = vst.msk [vmem:[%s9 + $0x128] sm:$0xff] %vm101, %v2543
  %2608 = vst.msk [vmem:[%s9 + $0x130] sm:$0xff] %vm101, %v2544
  %2609 = vst.msk [vmem:[%s9 + $0x138] sm:$0xff] %vm101, %v2545
  %2610 = vst.msk [vmem:[%s9 + $0x140] sm:$0xff] %vm101, %v2546
  %2611 = vst.msk [vmem:[%s9 + $0x148] sm:$0xff] %vm101, %v2547
  %2612 = vst.msk [vmem:[%s9 + $0x150] sm:$0xff] %vm101, %v2548
  %2613 = vst.msk [vmem:[%s9 + $0x158] sm:$0xff] %vm101, %v2549
  %2614 = vst.msk [vmem:[%s9 + $0x160] sm:$0xff] %vm101, %v2550
  %2615 = vst.msk [vmem:[%s9 + $0x168] sm:$0xff] %vm101, %v2551
  %2616 = vst.msk [vmem:[%s9 + $0x170] sm:$0xff] %vm101, %v2552
  %2617 = vst.msk [vmem:[%s9 + $0x178] sm:$0xff] %vm101, %v2553
  %2618 = vst.msk [vmem:[%s9 + $0x180] sm:$0xff] %vm101, %v2554
  %2619 = vst.msk [vmem:[%s9 + $0x188] sm:$0xff] %vm101, %v2555
  %2620 = vst.msk [vmem:[%s9 + $0x190] sm:$0xff] %vm101, %v2556
  %2621 = vst.msk [vmem:[%s9 + $0x198] sm:$0xff] %vm101, %v2557
  %2622 = vst.msk [vmem:[%s9 + $0x1a0] sm:$0xff] %vm101, %v2558
  %2623 = vst.msk [vmem:[%s9 + $0x1a8] sm:$0xff] %vm101, %v2559
  %2624 = vst.msk [vmem:[%s9 + $0x1b0] sm:$0xff] %vm101, %v2560
  %2625 = vst.msk [vmem:[%s9 + $0x1b8] sm:$0xff] %vm101, %v2561
  %2626 = vst.msk [vmem:[%s9 + $0x1c0] sm:$0xff] %vm101, %v2562
  %2627 = vst.msk [vmem:[%s9 + $0x1c8] sm:$0xff] %vm101, %v2563
  %2628 = vst.msk [vmem:[%s9 + $0x1d0] sm:$0xff] %vm101, %v2564
  %2629 = vst.msk [vmem:[%s9 + $0x1d8] sm:$0xff] %vm101, %v2565
  %2630 = vst.msk [vmem:[%s9 + $0x1e0] sm:$0xff] %vm101, %v2566
  %2631 = vst.msk [vmem:[%s9 + $0x1e8] sm:$0xff] %vm101, %v2567
  %2632 = vst.msk [vmem:[%s9 + $0x1f0] sm:$0xff] %vm101, %v2568
  %2633 = vst.msk [vmem:[%s9 + $0x1f8] sm:$0xff] %vm101, %v2569
  %2634 = vst.msk [vmem:[%s10] sm:$0xff] %vm101, %v2094
  %2635 = vst.msk [vmem:[%s10 + $0x8] sm:$0xff] %vm101, %v2097
  %2636 = vst.msk [vmem:[%s10 + $0x10] sm:$0xff] %vm101, %v2100
  %2637 = vst.msk [vmem:[%s10 + $0x18] sm:$0xff] %vm101, %v2103
  %2638 = vst.msk [vmem:[%s10 + $0x20] sm:$0xff] %vm101, %v2106
  %2639 = vst.msk [vmem:[%s10 + $0x28] sm:$0xff] %vm101, %v2109
  %2640 = vst.msk [vmem:[%s10 + $0x30] sm:$0xff] %vm101, %v2112
  %2641 = vst.msk [vmem:[%s10 + $0x38] sm:$0xff] %vm101, %v2115
  %2642 = vst.msk [vmem:[%s10 + $0x40] sm:$0xff] %vm101, %v2118
  %2643 = vst.msk [vmem:[%s10 + $0x48] sm:$0xff] %vm101, %v2121
  %2644 = vst.msk [vmem:[%s10 + $0x50] sm:$0xff] %vm101, %v2124
  %2645 = vst.msk [vmem:[%s10 + $0x58] sm:$0xff] %vm101, %v2127
  %2646 = vst.msk [vmem:[%s10 + $0x60] sm:$0xff] %vm101, %v2130
  %2647 = vst.msk [vmem:[%s10 + $0x68] sm:$0xff] %vm101, %v2133
  %2648 = vst.msk [vmem:[%s10 + $0x70] sm:$0xff] %vm101, %v2136
  %2649 = vst.msk [vmem:[%s10 + $0x78] sm:$0xff] %vm101, %v2139
  %2650 = vst.msk [vmem:[%s10 + $0x80] sm:$0xff] %vm101, %v2142
  %2651 = vst.msk [vmem:[%s10 + $0x88] sm:$0xff] %vm101, %v2145
  %2652 = vst.msk [vmem:[%s10 + $0x90] sm:$0xff] %vm101, %v2148
  %2653 = vst.msk [vmem:[%s10 + $0x98] sm:$0xff] %vm101, %v2151
  %2654 = vst.msk [vmem:[%s10 + $0xa0] sm:$0xff] %vm101, %v2154
  %2655 = vst.msk [vmem:[%s10 + $0xa8] sm:$0xff] %vm101, %v2157
  %2656 = vst.msk [vmem:[%s10 + $0xb0] sm:$0xff] %vm101, %v2160
  %2657 = vst.msk [vmem:[%s10 + $0xb8] sm:$0xff] %vm101, %v2163
  %2658 = vst.msk [vmem:[%s10 + $0xc0] sm:$0xff] %vm101, %v2166
  %2659 = vst.msk [vmem:[%s10 + $0xc8] sm:$0xff] %vm101, %v2169
  %2660 = vst.msk [vmem:[%s10 + $0xd0] sm:$0xff] %vm101, %v2172
  %2661 = vst.msk [vmem:[%s10 + $0xd8] sm:$0xff] %vm101, %v2175
  %2662 = vst.msk [vmem:[%s10 + $0xe0] sm:$0xff] %vm101, %v2178
  %2663 = vst.msk [vmem:[%s10 + $0xe8] sm:$0xff] %vm101, %v2181
  %2664 = vst.msk [vmem:[%s10 + $0xf0] sm:$0xff] %vm101, %v2184
  %2665 = vst.msk [vmem:[%s10 + $0xf8] sm:$0xff] %vm101, %v2187
  %2666 = vst.msk [vmem:[%s10 + $0x100] sm:$0xff] %vm101, %v2190
  %2667 = vst.msk [vmem:[%s10 + $0x108] sm:$0xff] %vm101, %v2193
  %2668 = vst.msk [vmem:[%s10 + $0x110] sm:$0xff] %vm101, %v2196
  %2669 = vst.msk [vmem:[%s10 + $0x118] sm:$0xff] %vm101, %v2199
  %2670 = vst.msk [vmem:[%s10 + $0x120] sm:$0xff] %vm101, %v2202
  %2671 = vst.msk [vmem:[%s10 + $0x128] sm:$0xff] %vm101, %v2205
  %2672 = vst.msk [vmem:[%s10 + $0x130] sm:$0xff] %vm101, %v2208
  %2673 = vst.msk [vmem:[%s10 + $0x138] sm:$0xff] %vm101, %v2211
  %2674 = vst.msk [vmem:[%s10 + $0x140] sm:$0xff] %vm101, %v2214
  %2675 = vst.msk [vmem:[%s10 + $0x148] sm:$0xff] %vm101, %v2217
  %2676 = vst.msk [vmem:[%s10 + $0x150] sm:$0xff] %vm101, %v2220
  %2677 = vst.msk [vmem:[%s10 + $0x158] sm:$0xff] %vm101, %v2223
  %2678 = vst.msk [vmem:[%s10 + $0x160] sm:$0xff] %vm101, %v2226
  %2679 = vst.msk [vmem:[%s10 + $0x168] sm:$0xff] %vm101, %v2229
  %2680 = vst.msk [vmem:[%s10 + $0x170] sm:$0xff] %vm101, %v2232
  %2681 = vst.msk [vmem:[%s10 + $0x178] sm:$0xff] %vm101, %v2235
  %2682 = vst.msk [vmem:[%s10 + $0x180] sm:$0xff] %vm101, %v2238
  %2683 = vst.msk [vmem:[%s10 + $0x188] sm:$0xff] %vm101, %v2241
  %2684 = vst.msk [vmem:[%s10 + $0x190] sm:$0xff] %vm101, %v2244
  %2685 = vst.msk [vmem:[%s10 + $0x198] sm:$0xff] %vm101, %v2247
  %2686 = vst.msk [vmem:[%s10 + $0x1a0] sm:$0xff] %vm101, %v2250
  %2687 = vst.msk [vmem:[%s10 + $0x1a8] sm:$0xff] %vm101, %v2253
  %2688 = vst.msk [vmem:[%s10 + $0x1b0] sm:$0xff] %vm101, %v2256
  %2689 = vst.msk [vmem:[%s10 + $0x1b8] sm:$0xff] %vm101, %v2259
  %2690 = vst.msk [vmem:[%s10 + $0x1c0] sm:$0xff] %vm101, %v2262
  %2691 = vst.msk [vmem:[%s10 + $0x1c8] sm:$0xff] %vm101, %v2265
  %2692 = vst.msk [vmem:[%s10 + $0x1d0] sm:$0xff] %vm101, %v2268
  %2693 = vst.msk [vmem:[%s10 + $0x1d8] sm:$0xff] %vm101, %v2271
  %2694 = vst.msk [vmem:[%s10 + $0x1e0] sm:$0xff] %vm101, %v2274
  %2695 = vst.msk [vmem:[%s10 + $0x1e8] sm:$0xff] %vm101, %v2277
  %2696 = vst.msk [vmem:[%s10 + $0x1f0] sm:$0xff] %vm101, %v2280
  %2697 = vst.msk [vmem:[%s10 + $0x1f8] sm:$0xff] %vm101, %v2283
  %2698 = vst.msk [vmem:[%s11] sm:$0xff] %vm101, %v2315
  %2699 = vst.msk [vmem:[%s11 + $0x8] sm:$0xff] %vm101, %v2318
  %2700 = vst.msk [vmem:[%s11 + $0x10] sm:$0xff] %vm101, %v2321
  %2701 = vst.msk [vmem:[%s11 + $0x18] sm:$0xff] %vm101, %v2324
  %2702 = vst.msk [vmem:[%s11 + $0x20] sm:$0xff] %vm101, %v2327
  %2703 = vst.msk [vmem:[%s11 + $0x28] sm:$0xff] %vm101, %v2330
  %2704 = vst.msk [vmem:[%s11 + $0x30] sm:$0xff] %vm101, %v2333
  %2705 = vst.msk [vmem:[%s11 + $0x38] sm:$0xff] %vm101, %v2336
  %2706 = vst.msk [vmem:[%s11 + $0x40] sm:$0xff] %vm101, %v2339
  %2707 = vst.msk [vmem:[%s11 + $0x48] sm:$0xff] %vm101, %v2342
  %2708 = vst.msk [vmem:[%s11 + $0x50] sm:$0xff] %vm101, %v2345
  %2709 = vst.msk [vmem:[%s11 + $0x58] sm:$0xff] %vm101, %v2348
  %2710 = vst.msk [vmem:[%s11 + $0x60] sm:$0xff] %vm101, %v2351
  %2711 = vst.msk [vmem:[%s11 + $0x68] sm:$0xff] %vm101, %v2354
  %2712 = vst.msk [vmem:[%s11 + $0x70] sm:$0xff] %vm101, %v2357
  %2713 = vst.msk [vmem:[%s11 + $0x78] sm:$0xff] %vm101, %v2360
  %2714 = vst.msk [vmem:[%s11 + $0x80] sm:$0xff] %vm101, %v2363
  %2715 = vst.msk [vmem:[%s11 + $0x88] sm:$0xff] %vm101, %v2366
  %2716 = vst.msk [vmem:[%s11 + $0x90] sm:$0xff] %vm101, %v2369
  %2717 = vst.msk [vmem:[%s11 + $0x98] sm:$0xff] %vm101, %v2372
  %2718 = vst.msk [vmem:[%s11 + $0xa0] sm:$0xff] %vm101, %v2375
  %2719 = vst.msk [vmem:[%s11 + $0xa8] sm:$0xff] %vm101, %v2378
  %2720 = vst.msk [vmem:[%s11 + $0xb0] sm:$0xff] %vm101, %v2381
  %2721 = vst.msk [vmem:[%s11 + $0xb8] sm:$0xff] %vm101, %v2384
  %2722 = vst.msk [vmem:[%s11 + $0xc0] sm:$0xff] %vm101, %v2387
  %2723 = vst.msk [vmem:[%s11 + $0xc8] sm:$0xff] %vm101, %v2390
  %2724 = vst.msk [vmem:[%s11 + $0xd0] sm:$0xff] %vm101, %v2393
  %2725 = vst.msk [vmem:[%s11 + $0xd8] sm:$0xff] %vm101, %v2396
  %2726 = vst.msk [vmem:[%s11 + $0xe0] sm:$0xff] %vm101, %v2399
  %2727 = vst.msk [vmem:[%s11 + $0xe8] sm:$0xff] %vm101, %v2402
  %2728 = vst.msk [vmem:[%s11 + $0xf0] sm:$0xff] %vm101, %v2405
  %2729 = vst.msk [vmem:[%s11 + $0xf8] sm:$0xff] %vm101, %v2408
  %2730 = vst.msk [vmem:[%s11 + $0x100] sm:$0xff] %vm101, %v2411
  %2731 = vst.msk [vmem:[%s11 + $0x108] sm:$0xff] %vm101, %v2414
  %2732 = vst.msk [vmem:[%s11 + $0x110] sm:$0xff] %vm101, %v2417
  %2733 = vst.msk [vmem:[%s11 + $0x118] sm:$0xff] %vm101, %v2420
  %2734 = vst.msk [vmem:[%s11 + $0x120] sm:$0xff] %vm101, %v2423
  %2735 = vst.msk [vmem:[%s11 + $0x128] sm:$0xff] %vm101, %v2426
  %2736 = vst.msk [vmem:[%s11 + $0x130] sm:$0xff] %vm101, %v2429
  %2737 = vst.msk [vmem:[%s11 + $0x138] sm:$0xff] %vm101, %v2432
  %2738 = vst.msk [vmem:[%s11 + $0x140] sm:$0xff] %vm101, %v2435
  %2739 = vst.msk [vmem:[%s11 + $0x148] sm:$0xff] %vm101, %v2438
  %2740 = vst.msk [vmem:[%s11 + $0x150] sm:$0xff] %vm101, %v2441
  %2741 = vst.msk [vmem:[%s11 + $0x158] sm:$0xff] %vm101, %v2444
  %2742 = vst.msk [vmem:[%s11 + $0x160] sm:$0xff] %vm101, %v2447
  %2743 = vst.msk [vmem:[%s11 + $0x168] sm:$0xff] %vm101, %v2450
  %2744 = vst.msk [vmem:[%s11 + $0x170] sm:$0xff] %vm101, %v2453
  %2745 = vst.msk [vmem:[%s11 + $0x178] sm:$0xff] %vm101, %v2456
  %2746 = vst.msk [vmem:[%s11 + $0x180] sm:$0xff] %vm101, %v2459
  %2747 = vst.msk [vmem:[%s11 + $0x188] sm:$0xff] %vm101, %v2462
  %2748 = vst.msk [vmem:[%s11 + $0x190] sm:$0xff] %vm101, %v2465
  %2749 = vst.msk [vmem:[%s11 + $0x198] sm:$0xff] %vm101, %v2468
  %2750 = vst.msk [vmem:[%s11 + $0x1a0] sm:$0xff] %vm101, %v2471
  %2751 = vst.msk [vmem:[%s11 + $0x1a8] sm:$0xff] %vm101, %v2474
  %2752 = vst.msk [vmem:[%s11 + $0x1b0] sm:$0xff] %vm101, %v2477
  %2753 = vst.msk [vmem:[%s11 + $0x1b8] sm:$0xff] %vm101, %v2480
  %2754 = vst.msk [vmem:[%s11 + $0x1c0] sm:$0xff] %vm101, %v2483
  %2755 = vst.msk [vmem:[%s11 + $0x1c8] sm:$0xff] %vm101, %v2486
  %2756 = vst.msk [vmem:[%s11 + $0x1d0] sm:$0xff] %vm101, %v2489
  %2757 = vst.msk [vmem:[%s11 + $0x1d8] sm:$0xff] %vm101, %v2492
  %2758 = vst.msk [vmem:[%s11 + $0x1e0] sm:$0xff] %vm101, %v2495
  %2759 = vst.msk [vmem:[%s11 + $0x1e8] sm:$0xff] %vm101, %v2498
  %2760 = vst.msk [vmem:[%s11 + $0x1f0] sm:$0xff] %vm101, %v2501
  %2761 = vst.msk [vmem:[%s11 + $0x1f8] sm:$0xff] %vm101, %v2504
  // Predicated region
  $region38: #{tpu_custom_call.1} parent=0 // pred_check
    _
  $region39: #{tpu_custom_call.1} parent=0 // pred_check_branch
    %2763 = sbr.rel (0) target = $region41
  $region40: #{tpu_custom_call.1} parent=0 // pred_region
    _
  $region41: #{tpu_custom_call.1} parent=0 // pred_fallthru
    _
  // Predicated region
  $region42: #{tpu_custom_call.1} parent=0 // pred_check
    _
  $region43: #{tpu_custom_call.1} parent=0 // pred_check_branch
    %2765 = sbr.rel (0) target = $region45
  $region44: #{tpu_custom_call.1} parent=0 // pred_region
    _
  $region45: #{tpu_custom_call.1} parent=0 // pred_fallthru
    _
  // Predicated region
  $region46: #{tpu_custom_call.1} parent=0 // pred_check
    _
  $region47: #{tpu_custom_call.1} parent=0 // pred_check_branch
    %2767 = sbr.rel (0) target = $region49
  $region48: #{tpu_custom_call.1} parent=0 // pred_region
    _
  $region49: #{tpu_custom_call.1} parent=0 // pred_fallthru
    _
  // Predicated region
  $region50: #{tpu_custom_call.1} parent=0 // pred_check
    _
  $region51: #{tpu_custom_call.1} parent=0 // pred_check_branch
    %2769 = sbr.rel (0) target = $region53
  $region52: #{tpu_custom_call.1} parent=0 // pred_region
    _
  $region53: #{tpu_custom_call.1} parent=0 // pred_fallthru
    _
  // Predicated region
  $region54: #{tpu_custom_call.1} parent=0 // pred_check
    _
  $region55: #{tpu_custom_call.1} parent=0 // pred_check_branch
    %2771 = sbr.rel (0) target = $region57
  $region56: #{tpu_custom_call.1} parent=0 // pred_region
    _
  $region57: #{tpu_custom_call.1} parent=0 // pred_fallthru
    _
  // Predicated region
  $region58: #{tpu_custom_call.1} parent=0 // pred_check
    _
  $region59: #{tpu_custom_call.1} parent=0 // pred_check_branch
    %2773 = sbr.rel (0) target = $region61
  $region60: #{tpu_custom_call.1} parent=0 // pred_region
    _
  $region61: #{tpu_custom_call.1} parent=0 // pred_fallthru
    _

</llo_original>
